<compile_context>
chip_gen: v6e
topology: v6e:2x2x1
jax: 0.10.0
libtpu: 0.0.40
codegen_flags: <defaults>
</compile_context>

<pallas_src>
import jax
import jax.numpy as jnp
from jax.experimental import pallas as pl
from jax.experimental.pallas import tpu as pltpu


def _arb_kernel(x_ref, w3k_ref, w1_ref, b1_ref, wh_ref, bh_ref, ww_ref, bw_ref,
                o_ref, xp_ref):
    # x_ref  : (1, H, W, C)   input image (f32); also the residual base
    # w3k_ref: (3, 3*C, C)    bf16 3x3 conv taps regrouped by ky (K = 3C)
    # w1_ref : (C, mip)  b1_ref: (1, mip)
    # wh_ref/ww_ref: (mip, C)  bh_ref/bw_ref: (1, C)
    # o_ref  : (1, H, W, C)
    # xp_ref : (H+2, W+16, C) f32 VMEM scratch holding the zero-padded image.
    #          Interior at rows [1, H+1), cols [LO, LO+W); LO=8 keeps the
    #          per-step interior store sublane-aligned.
    H, W, C = x_ref.shape[1], x_ref.shape[2], x_ref.shape[3]
    LO = 8

    # Build the zero-padded copy of this image in VMEM (no HBM pad pass).
    # The whole scratch is re-zeroed every step so correctness does not depend
    # on which core of a megacore chip ran step 0.
    xp_ref[...] = jnp.zeros_like(xp_ref)
    xp_ref[1:H + 1, LO:LO + W, :] = x_ref[0]

    # --- 3x3 conv (bias=False): 3 bf16 MXU matmuls with K = 3*C -------------
    # xcat[h_pad, w, kx*C + ci] = x_pad[h_pad, w + kx - 1, ci]
    xcat = jnp.concatenate(
        [xp_ref[:, LO - 1:LO - 1 + W, :],          # kx = 0
         xp_ref[:, LO:LO + W, :],                  # kx = 1
         xp_ref[:, LO + 1:LO + 1 + W, :]],         # kx = 2
        axis=-1).astype(jnp.bfloat16)              # (H+2, W, 3C)
    xcat = xcat.reshape((H + 2) * W, 3 * C)        # lane dim unchanged: cheap
    acc = jnp.zeros((H * W, C), jnp.float32)
    for ky in range(3):
        patch = xcat[ky * W:ky * W + H * W]        # rows for padded h = h + ky
        acc = acc + jnp.dot(patch, w3k_ref[ky],
                            preferred_element_type=jnp.float32)
    c3 = acc.reshape(H, W, C)                      # conv output, f32

    # --- CAttention ----------------------------------------------------------
    xh = jnp.mean(c3, axis=1)                      # pool over W -> (H, C)
    xw = jnp.mean(c3, axis=0)                      # pool over H -> (W, C)
    y = jnp.concatenate([xh, xw], axis=0)          # (H+W, C)
    y1 = jnp.dot(y, w1_ref[...], preferred_element_type=jnp.float32)
    y1 = y1 + b1_ref[...]                          # (H+W, mip)
    # h_swish: x * relu6(x + 3) / 6
    y1 = y1 * (jnp.clip(y1 + 3.0, 0.0, 6.0) * (1.0 / 6.0))

    a_h = jax.nn.sigmoid(
        jnp.dot(y1[:H], wh_ref[...], preferred_element_type=jnp.float32)
        + bh_ref[...])                             # (H, C)
    a_w = jax.nn.sigmoid(
        jnp.dot(y1[H:], ww_ref[...], preferred_element_type=jnp.float32)
        + bw_ref[...])                             # (W, C)

    att = c3 * a_w[None, :, :] * a_h[:, None, :]   # (H, W, C)

    # --- residual: read x late from the ref, add, store ---------------------
    o_ref[0] = (x_ref[0] + att).astype(o_ref.dtype)


def arb_forward(x_nhwc, params):
    """x_nhwc: (N, H, W, C) float32. Returns (N, H, W, C)."""
    w3, w1, b1, wh, bh, ww, bw = params            # w3: (3, 3, C, C) HWIO, f32
    N, H, W, C = x_nhwc.shape
    mip = w1.shape[1]
    WP = W + 16                                    # padded scratch width (LO=8)

    # Regroup the 3x3 taps by ky into a K=3C contraction; bf16 for the MXU.
    w3k = w3.reshape(3, 3 * C, C).astype(jnp.bfloat16)

    # Explicit VMEM budget (feedback): tile-padded block + scratch sizes,
    # double buffering on the streamed in/out blocks, plus headroom for
    # kernel-internal temporaries.  Clamped to stay inside v7x's 64 MiB.
    lane = lambda c: -(-c // 128) * 128
    sub = lambda s: -(-s // 8) * 8
    io_block = H * sub(W) * lane(C) * 4            # one (1,H,W,C) f32 block
    scratch = (H + 2) * sub(WP) * lane(C) * 4      # padded f32 image scratch
    est = 2 * 2 * io_block + scratch + (16 << 20)
    vmem_limit_bytes = int(min(max(est, 32 << 20), 64 << 20))

    full = lambda shape: pl.BlockSpec(shape, lambda n: (0,) * len(shape))

    return pl.pallas_call(
        _arb_kernel,
        out_shape=jax.ShapeDtypeStruct((N, H, W, C), x_nhwc.dtype),
        grid_spec=pltpu.PrefetchScalarGridSpec(
            num_scalar_prefetch=0,
            grid=(N,),
            in_specs=[
                pl.BlockSpec((1, H, W, C), lambda n: (n, 0, 0, 0)),
                full((3, 3 * C, C)),
                full((C, mip)),
                full((1, mip)),
                full((mip, C)),
                full((1, C)),
                full((mip, C)),
                full((1, C)),
            ],
            out_specs=pl.BlockSpec((1, H, W, C), lambda n: (n, 0, 0, 0)),
            scratch_shapes=[pltpu.VMEM((H + 2, WP, C), jnp.float32)],
        ),
        compiler_params=pltpu.CompilerParams(
            dimension_semantics=("parallel",),
            vmem_limit_bytes=vmem_limit_bytes),
    )(x_nhwc, w3k, w1, b1, wh, bh, ww, bw)


def arb_reference(x_nhwc, params, conv_dtype=jnp.float32):
    """Pure-JAX reference of ARB.forward (NHWC).

    conv_dtype=bfloat16 reproduces the kernel's bf16 MXU conv operands while
    keeping everything else (attention, residual) in f32.
    """
    w3, w1, b1, wh, bh, ww, bw = params
    N, H, W, C = x_nhwc.shape
    xc = x_nhwc.astype(conv_dtype).astype(jnp.float32)
    wc = w3.astype(conv_dtype).astype(jnp.float32)
    c3 = jax.lax.conv_general_dilated(
        xc, wc, window_strides=(1, 1), padding="SAME",
        dimension_numbers=("NHWC", "HWIO", "NHWC"))
    xh = c3.mean(axis=2)                           # (N, H, C)
    xw = c3.mean(axis=1)                           # (N, W, C)
    y = jnp.concatenate([xh, xw], axis=1)          # (N, H+W, C)
    y1 = y @ w1 + b1
    y1 = y1 * jnp.clip(y1 + 3.0, 0.0, 6.0) / 6.0
    yh, yw = y1[:, :H], y1[:, H:]
    a_h = jax.nn.sigmoid(yh @ wh + bh)             # (N, H, C)
    a_w = jax.nn.sigmoid(yw @ ww + bw)             # (N, W, C)
    att = c3 * a_w[:, None, :, :] * a_h[:, :, None, :]
    return x_nhwc + att


def make_params(key, dim, att_reduction_ratio=4.0):
    mip = max(4, int(dim / att_reduction_ratio))
    ks = jax.random.split(key, 5)
    # 3x3 conv weight in HWIO
    w3 = jax.random.normal(ks[0], (3, 3, dim, dim), jnp.float32) * 0.1
    w1 = jax.random.normal(ks[1], (dim, mip), jnp.float32) * 0.1
    b1 = jax.random.normal(ks[2], (1, mip), jnp.float32) * 0.1
    wh = jax.random.normal(ks[3], (mip, dim), jnp.float32) * 0.1
    bh = jnp.full((1, dim), 0.05, jnp.float32)
    ww = jax.random.normal(ks[4], (mip, dim), jnp.float32) * 0.1
    bw = jnp.full((1, dim), -0.05, jnp.float32)
    return (w3, w1, b1, wh, bh, ww, bw)


if __name__ == "__main__":
    N, C, H, W = 2, 8, 16, 16     # small shapes; PyTorch x would be (N, C, H, W)
    key = jax.random.PRNGKey(0)
    kx, kp = jax.random.split(key)

    x_nchw = jax.random.normal(kx, (N, C, H, W), jnp.float32)
    x_nhwc = jnp.transpose(x_nchw, (0, 2, 3, 1))  # NCHW -> NHWC (glue)

    params = make_params(kp, dim=C)

    out = arb_forward(x_nhwc, params)
    out = jax.block_until_ready(out)
    assert out.shape == (N, H, W, C)

    # Tight check vs. a reference whose 3x3 conv also uses bf16-rounded
    # operands (matches the kernel's bf16 MXU conv, f32 everywhere else).
    ref_bf16 = arb_reference(x_nhwc, params, conv_dtype=jnp.bfloat16)
    assert jnp.allclose(out, ref_bf16, rtol=2e-3, atol=2e-3), \
        "mismatch vs bf16-conv reference"

    # Loose check vs. the full-f32 module semantics (bf16 conv rounding only).
    ref_f32 = arb_reference(x_nhwc, params)
    assert jnp.allclose(out, ref_f32, rtol=5e-2, atol=5e-2), \
        "mismatch vs f32 reference"

    print("KERNEL_OK")
</pallas_src>

<mosaic_0001>
module attributes {stable_mosaic.version = 11 : i64} {
  func.func @_arb_kernel(%arg0: i32, %arg1: memref<1x16x16x8xf32, #tpu.memory_space<vmem>>, %arg2: memref<3x24x8xbf16, #tpu.memory_space<vmem>>, %arg3: memref<8x4xf32, #tpu.memory_space<vmem>>, %arg4: memref<1x4xf32, #tpu.memory_space<vmem>>, %arg5: memref<4x8xf32, #tpu.memory_space<vmem>>, %arg6: memref<1x8xf32, #tpu.memory_space<vmem>>, %arg7: memref<4x8xf32, #tpu.memory_space<vmem>>, %arg8: memref<1x8xf32, #tpu.memory_space<vmem>>, %arg9: memref<1x16x16x8xf32, #tpu.memory_space<vmem>>, %arg10: memref<18x32x8xf32, #tpu.memory_space<vmem>>) attributes {dimension_semantics = [#tpu.dimension_semantics<parallel>], iteration_bounds = array<i64: 2>, scalar_prefetch = 0 : i64, scratch_operands = 1 : i64, tpu.core_type = #tpu.core_type<tc>, window_params = [{transform_indices = @transform_0, window_bounds = array<i64: 1, 16, 16, 8>}, {pipeline_mode = #tpu.pipeline_mode<synchronous>, transform_indices = @transform_1, window_bounds = array<i64: 3, 24, 8>}, {pipeline_mode = #tpu.pipeline_mode<synchronous>, transform_indices = @transform_2, window_bounds = array<i64: 8, 4>}, {pipeline_mode = #tpu.pipeline_mode<synchronous>, transform_indices = @transform_3, window_bounds = array<i64: 1, 4>}, {pipeline_mode = #tpu.pipeline_mode<synchronous>, transform_indices = @transform_4, window_bounds = array<i64: 4, 8>}, {pipeline_mode = #tpu.pipeline_mode<synchronous>, transform_indices = @transform_5, window_bounds = array<i64: 1, 8>}, {pipeline_mode = #tpu.pipeline_mode<synchronous>, transform_indices = @transform_6, window_bounds = array<i64: 4, 8>}, {pipeline_mode = #tpu.pipeline_mode<synchronous>, transform_indices = @transform_7, window_bounds = array<i64: 1, 8>}, {transform_indices = @transform_8, window_bounds = array<i64: 1, 16, 16, 8>}]} {
    %cst = arith.constant 0.000000e+00 : f32
    %0 = vector.broadcast %cst : f32 to vector<18x32x8xf32>
    %c0 = arith.constant 0 : index
    %c0_0 = arith.constant 0 : index
    %c0_1 = arith.constant 0 : index
    %1 = vector.load %arg10[%c0, %c0_0, %c0_1] : memref<18x32x8xf32, #tpu.memory_space<vmem>>, vector<18x32x8xf32>
    tpu.vector_store %arg10[%c0, %c0_0, %c0_1], %0 {strides = array<i32>} : memref<18x32x8xf32, #tpu.memory_space<vmem>>, vector<18x32x8xf32>,
    %c0_2 = arith.constant 0 : index
    %c0_3 = arith.constant 0 : index
    %c0_4 = arith.constant 0 : index
    %c0_5 = arith.constant 0 : index
    %2 = vector.load %arg1[%c0_2, %c0_3, %c0_4, %c0_5] : memref<1x16x16x8xf32, #tpu.memory_space<vmem>>, vector<1x16x16x8xf32>
    %3 = vector.shape_cast %2 : vector<1x16x16x8xf32> to vector<16x16x8xf32>
    %c1 = arith.constant 1 : index
    %c8 = arith.constant 8 : index
    %c0_6 = arith.constant 0 : index
    %4 = vector.load %arg10[%c1, %c8, %c0_6] : memref<18x32x8xf32, #tpu.memory_space<vmem>>, vector<16x16x8xf32>
    tpu.vector_store %arg10[%c1, %c8, %c0_6], %3 {strides = array<i32>} : memref<18x32x8xf32, #tpu.memory_space<vmem>>, vector<16x16x8xf32>,
    %c0_7 = arith.constant 0 : index
    %c7 = arith.constant 7 : index
    %c0_8 = arith.constant 0 : index
    %5 = vector.load %arg10[%c0_7, %c7, %c0_8] : memref<18x32x8xf32, #tpu.memory_space<vmem>>, vector<18x16x8xf32>
    %c0_9 = arith.constant 0 : index
    %c8_10 = arith.constant 8 : index
    %c0_11 = arith.constant 0 : index
    %6 = vector.load %arg10[%c0_9, %c8_10, %c0_11] : memref<18x32x8xf32, #tpu.memory_space<vmem>>, vector<18x16x8xf32>
    %c0_12 = arith.constant 0 : index
    %c9 = arith.constant 9 : index
    %c0_13 = arith.constant 0 : index
    %7 = vector.load %arg10[%c0_12, %c9, %c0_13] : memref<18x32x8xf32, #tpu.memory_space<vmem>>, vector<18x16x8xf32>
    %8 = tpu.concatenate %5, %6, %7 in 2 : vector<18x16x8xf32>, vector<18x16x8xf32>, vector<18x16x8xf32> -> vector<18x16x24xf32>
    %9 = arith.truncf %8 : vector<18x16x24xf32> to vector<18x16x24xbf16>
    %10 = vector.shape_cast %9 : vector<18x16x24xbf16> to vector<288x24xbf16>
    %cst_14 = arith.constant 0.000000e+00 : f32
    %11 = vector.broadcast %cst_14 : f32 to vector<256x8xf32>
    %12 = vector.extract_strided_slice %10 {offsets = [0, 0], sizes = [256, 24], strides = [1, 1]} : vector<288x24xbf16> to vector<256x24xbf16>
    %c0_15 = arith.constant 0 : index
    %c0_16 = arith.constant 0 : index
    %c0_17 = arith.constant 0 : index
    %13 = vector.load %arg2[%c0_15, %c0_16, %c0_17] : memref<3x24x8xbf16, #tpu.memory_space<vmem>>, vector<1x24x8xbf16>
    %14 = vector.shape_cast %13 : vector<1x24x8xbf16> to vector<24x8xbf16>
    %cst_18 = arith.constant dense<0.000000e+00> : vector<256x8xf32>
    %15 = tpu.matmul %12, %14, %cst_18 {dimension_numbers = #tpu.dot_dimension_numbers<[1], [0], [0], [1], [0, 0, 1, 1], [], []>} : vector<256x24xbf16>, vector<24x8xbf16>, vector<256x8xf32> -> vector<256x8xf32>
    %16 = arith.addf %11, %15 : vector<256x8xf32>
    %17 = vector.extract_strided_slice %10 {offsets = [16, 0], sizes = [256, 24], strides = [1, 1]} : vector<288x24xbf16> to vector<256x24xbf16>
    %c1_19 = arith.constant 1 : index
    %c0_20 = arith.constant 0 : index
    %c0_21 = arith.constant 0 : index
    %18 = vector.load %arg2[%c1_19, %c0_20, %c0_21] : memref<3x24x8xbf16, #tpu.memory_space<vmem>>, vector<1x24x8xbf16>
    %19 = vector.shape_cast %18 : vector<1x24x8xbf16> to vector<24x8xbf16>
    %cst_22 = arith.constant dense<0.000000e+00> : vector<256x8xf32>
    %20 = tpu.matmul %17, %19, %cst_22 {dimension_numbers = #tpu.dot_dimension_numbers<[1], [0], [0], [1], [0, 0, 1, 1], [], []>} : vector<256x24xbf16>, vector<24x8xbf16>, vector<256x8xf32> -> vector<256x8xf32>
    %21 = arith.addf %16, %20 : vector<256x8xf32>
    %22 = vector.extract_strided_slice %10 {offsets = [32, 0], sizes = [256, 24], strides = [1, 1]} : vector<288x24xbf16> to vector<256x24xbf16>
    %c2 = arith.constant 2 : index
    %c0_23 = arith.constant 0 : index
    %c0_24 = arith.constant 0 : index
    %23 = vector.load %arg2[%c2, %c0_23, %c0_24] : memref<3x24x8xbf16, #tpu.memory_space<vmem>>, vector<1x24x8xbf16>
    %24 = vector.shape_cast %23 : vector<1x24x8xbf16> to vector<24x8xbf16>
    %cst_25 = arith.constant dense<0.000000e+00> : vector<256x8xf32>
    %25 = tpu.matmul %22, %24, %cst_25 {dimension_numbers = #tpu.dot_dimension_numbers<[1], [0], [0], [1], [0, 0, 1, 1], [], []>} : vector<256x24xbf16>, vector<24x8xbf16>, vector<256x8xf32> -> vector<256x8xf32>
    %26 = arith.addf %21, %25 : vector<256x8xf32>
    %27 = vector.shape_cast %26 : vector<256x8xf32> to vector<16x16x8xf32>
    %cst_26 = arith.constant dense<0.000000e+00> : vector<16x8xf32>
    %28 = vector.multi_reduction <add>, %27, %cst_26 [1] : vector<16x16x8xf32> to vector<16x8xf32>
    %cst_27 = arith.constant 1.600000e+01 : f32
    %29 = vector.broadcast %cst_27 : f32 to vector<16x8xf32>
    %30 = arith.divf %28, %29 : vector<16x8xf32>
    %cst_28 = arith.constant dense<0.000000e+00> : vector<16x8xf32>
    %31 = vector.multi_reduction <add>, %27, %cst_28 [0] : vector<16x16x8xf32> to vector<16x8xf32>
    %cst_29 = arith.constant 1.600000e+01 : f32
    %32 = vector.broadcast %cst_29 : f32 to vector<16x8xf32>
    %33 = arith.divf %31, %32 : vector<16x8xf32>
    %34 = tpu.concatenate %30, %33 in 0 : vector<16x8xf32>, vector<16x8xf32> -> vector<32x8xf32>
    %c0_30 = arith.constant 0 : index
    %c0_31 = arith.constant 0 : index
    %35 = vector.load %arg3[%c0_30, %c0_31] : memref<8x4xf32, #tpu.memory_space<vmem>>, vector<8x4xf32>
    %cst_32 = arith.constant dense<0.000000e+00> : vector<32x4xf32>
    %36 = tpu.matmul %34, %35, %cst_32 {dimension_numbers = #tpu.dot_dimension_numbers<[1], [0], [0], [1], [0, 0, 1, 1], [], []>} : vector<32x8xf32>, vector<8x4xf32>, vector<32x4xf32> -> vector<32x4xf32>
    %c0_33 = arith.constant 0 : index
    %c0_34 = arith.constant 0 : index
    %37 = vector.load %arg4[%c0_33, %c0_34] : memref<1x4xf32, #tpu.memory_space<vmem>>, vector<1x4xf32>
    %38 = vector.broadcast %37 : vector<1x4xf32> to vector<32x4xf32>
    %39 = arith.addf %36, %38 : vector<32x4xf32>
    %cst_35 = arith.constant 3.000000e+00 : f32
    %40 = vector.broadcast %cst_35 : f32 to vector<32x4xf32>
    %41 = arith.addf %39, %40 : vector<32x4xf32>
    %cst_36 = arith.constant 0.000000e+00 : f32
    %cst_37 = arith.constant 6.000000e+00 : f32
    %42 = vector.broadcast %cst_36 : f32 to vector<32x4xf32>
    %43 = arith.maximumf %42, %41 : vector<32x4xf32>
    %44 = vector.broadcast %cst_37 : f32 to vector<32x4xf32>
    %45 = arith.minimumf %44, %43 : vector<32x4xf32>
    %cst_38 = arith.constant 0.166666672 : f32
    %46 = vector.broadcast %cst_38 : f32 to vector<32x4xf32>
    %47 = arith.mulf %45, %46 : vector<32x4xf32>
    %48 = arith.mulf %39, %47 : vector<32x4xf32>
    %49 = vector.extract_strided_slice %48 {offsets = [0, 0], sizes = [16, 4], strides = [1, 1]} : vector<32x4xf32> to vector<16x4xf32>
    %c0_39 = arith.constant 0 : index
    %c0_40 = arith.constant 0 : index
    %50 = vector.load %arg5[%c0_39, %c0_40] : memref<4x8xf32, #tpu.memory_space<vmem>>, vector<4x8xf32>
    %cst_41 = arith.constant dense<0.000000e+00> : vector<16x8xf32>
    %51 = tpu.matmul %49, %50, %cst_41 {dimension_numbers = #tpu.dot_dimension_numbers<[1], [0], [0], [1], [0, 0, 1, 1], [], []>} : vector<16x4xf32>, vector<4x8xf32>, vector<16x8xf32> -> vector<16x8xf32>
    %c0_42 = arith.constant 0 : index
    %c0_43 = arith.constant 0 : index
    %52 = vector.load %arg6[%c0_42, %c0_43] : memref<1x8xf32, #tpu.memory_space<vmem>>, vector<1x8xf32>
    %53 = vector.broadcast %52 : vector<1x8xf32> to vector<16x8xf32>
    %54 = arith.addf %51, %53 : vector<16x8xf32>
    %55 = arith.negf %54 : vector<16x8xf32>
    %56 = math.exp %55 : vector<16x8xf32>
    %cst_44 = arith.constant 1.000000e+00 : f32
    %57 = vector.broadcast %cst_44 : f32 to vector<16x8xf32>
    %58 = arith.addf %57, %56 : vector<16x8xf32>
    %59 = arith.divf %57, %58 : vector<16x8xf32>
    %60 = vector.extract_strided_slice %48 {offsets = [16, 0], sizes = [16, 4], strides = [1, 1]} : vector<32x4xf32> to vector<16x4xf32>
    %c0_45 = arith.constant 0 : index
    %c0_46 = arith.constant 0 : index
    %61 = vector.load %arg7[%c0_45, %c0_46] : memref<4x8xf32, #tpu.memory_space<vmem>>, vector<4x8xf32>
    %cst_47 = arith.constant dense<0.000000e+00> : vector<16x8xf32>
    %62 = tpu.matmul %60, %61, %cst_47 {dimension_numbers = #tpu.dot_dimension_numbers<[1], [0], [0], [1], [0, 0, 1, 1], [], []>} : vector<16x4xf32>, vector<4x8xf32>, vector<16x8xf32> -> vector<16x8xf32>
    %c0_48 = arith.constant 0 : index
    %c0_49 = arith.constant 0 : index
    %63 = vector.load %arg8[%c0_48, %c0_49] : memref<1x8xf32, #tpu.memory_space<vmem>>, vector<1x8xf32>
    %64 = vector.broadcast %63 : vector<1x8xf32> to vector<16x8xf32>
    %65 = arith.addf %62, %64 : vector<16x8xf32>
    %66 = arith.negf %65 : vector<16x8xf32>
    %67 = math.exp %66 : vector<16x8xf32>
    %cst_50 = arith.constant 1.000000e+00 : f32
    %68 = vector.broadcast %cst_50 : f32 to vector<16x8xf32>
    %69 = arith.addf %68, %67 : vector<16x8xf32>
    %70 = arith.divf %68, %69 : vector<16x8xf32>
    %71 = vector.shape_cast %70 : vector<16x8xf32> to vector<1x16x8xf32>
    %72 = vector.broadcast %71 : vector<1x16x8xf32> to vector<16x16x8xf32>
    %73 = arith.mulf %27, %72 : vector<16x16x8xf32>
    %74 = vector.shape_cast %59 : vector<16x8xf32> to vector<16x1x8xf32>
    %75 = vector.broadcast %74 : vector<16x1x8xf32> to vector<16x16x8xf32>
    %76 = arith.mulf %73, %75 : vector<16x16x8xf32>
    %c0_51 = arith.constant 0 : index
    %c0_52 = arith.constant 0 : index
    %c0_53 = arith.constant 0 : index
    %c0_54 = arith.constant 0 : index
    %77 = vector.load %arg1[%c0_51, %c0_52, %c0_53, %c0_54] : memref<1x16x16x8xf32, #tpu.memory_space<vmem>>, vector<1x16x16x8xf32>
    %78 = vector.shape_cast %77 : vector<1x16x16x8xf32> to vector<16x16x8xf32>
    %79 = arith.addf %78, %76 : vector<16x16x8xf32>
    %c0_55 = arith.constant 0 : index
    %c0_56 = arith.constant 0 : index
    %c0_57 = arith.constant 0 : index
    %c0_58 = arith.constant 0 : index
    %80 = vector.load %arg9[%c0_55, %c0_56, %c0_57, %c0_58] : memref<1x16x16x8xf32, #tpu.memory_space<vmem>>, vector<1x16x16x8xf32>
    %81 = vector.shape_cast %80 : vector<1x16x16x8xf32> to vector<16x16x8xf32>
    %82 = vector.shape_cast %79 : vector<16x16x8xf32> to vector<1x16x16x8xf32>
    tpu.vector_store %arg9[%c0_55, %c0_56, %c0_57, %c0_58], %82 {strides = array<i32>} : memref<1x16x16x8xf32, #tpu.memory_space<vmem>>, vector<1x16x16x8xf32>,
    return
  }
  func.func @transform_0(%arg0: i32) -> (i32, i32, i32, i32) {
    %c0_i32 = arith.constant 0 : i32
    %c0_i32_0 = arith.constant 0 : i32
    %c0_i32_1 = arith.constant 0 : i32
    %c0_i32_2 = arith.constant 0 : i32
    return %arg0, %c0_i32, %c0_i32_0, %c0_i32_1 : i32, i32, i32, i32
  }
  func.func @transform_1(%arg0: i32) -> (i32, i32, i32) {
    %c0_i32 = arith.constant 0 : i32
    %c0_i32_0 = arith.constant 0 : i32
    %c0_i32_1 = arith.constant 0 : i32
    %c0_i32_2 = arith.constant 0 : i32
    return %c0_i32, %c0_i32_0, %c0_i32_1 : i32, i32, i32
  }
  func.func @transform_2(%arg0: i32) -> (i32, i32) {
    %c0_i32 = arith.constant 0 : i32
    %c0_i32_0 = arith.constant 0 : i32
    %c0_i32_1 = arith.constant 0 : i32
    return %c0_i32, %c0_i32_0 : i32, i32
  }
  func.func @transform_3(%arg0: i32) -> (i32, i32) {
    %c0_i32 = arith.constant 0 : i32
    %c0_i32_0 = arith.constant 0 : i32
    %c0_i32_1 = arith.constant 0 : i32
    return %c0_i32, %c0_i32_0 : i32, i32
  }
  func.func @transform_4(%arg0: i32) -> (i32, i32) {
    %c0_i32 = arith.constant 0 : i32
    %c0_i32_0 = arith.constant 0 : i32
    %c0_i32_1 = arith.constant 0 : i32
    return %c0_i32, %c0_i32_0 : i32, i32
  }
  func.func @transform_5(%arg0: i32) -> (i32, i32) {
    %c0_i32 = arith.constant 0 : i32
    %c0_i32_0 = arith.constant 0 : i32
    %c0_i32_1 = arith.constant 0 : i32
    return %c0_i32, %c0_i32_0 : i32, i32
  }
  func.func @transform_6(%arg0: i32) -> (i32, i32) {
    %c0_i32 = arith.constant 0 : i32
    %c0_i32_0 = arith.constant 0 : i32
    %c0_i32_1 = arith.constant 0 : i32
    return %c0_i32, %c0_i32_0 : i32, i32
  }
  func.func @transform_7(%arg0: i32) -> (i32, i32) {
    %c0_i32 = arith.constant 0 : i32
    %c0_i32_0 = arith.constant 0 : i32
    %c0_i32_1 = arith.constant 0 : i32
    return %c0_i32, %c0_i32_0 : i32, i32
  }
  func.func @transform_8(%arg0: i32) -> (i32, i32, i32, i32) {
    %c0_i32 = arith.constant 0 : i32
    %c0_i32_0 = arith.constant 0 : i32
    %c0_i32_1 = arith.constant 0 : i32
    %c0_i32_2 = arith.constant 0 : i32
    return %arg0, %c0_i32, %c0_i32_0, %c0_i32_1 : i32, i32, i32, i32
  }
}

</mosaic_0001>

<llo_original>
// kernel: tpu_custom_call.1
$region0: #{tpu_custom_call.1}
  #allocation0 [shape = 'u32[]', space=smem, size = 0x4, offset = 0x4, fixed_abs, tag = 'smem constant byte address 0x4 - core index']
  #allocation1 [shape = 'u32[144,128]{1,0:T(1,128)}', space=vmem, size = 0x12000, scoped, tag = 'internal scratch']
  #allocation2 [shape = 'f32[18,32,8]{2,1,0:T(8,128)}', space=vmem, size = 0x48000, scoped, tag = 'scratch operand']
  %s0 = inlined_call_operand.vmem [shape: f32[2,16,16,8], index: 0, kind: input, shape index: {}]
  %s1 = inlined_call_operand.vmem [shape: bf16[3,24,8], index: 1, kind: input, shape index: {}]
  %s2 = inlined_call_operand.vmem [shape: f32[8,4], index: 2, kind: input, shape index: {}]
  %s3 = inlined_call_operand.vmem [shape: f32[1,4], index: 3, kind: input, shape index: {}]
  %s4 = inlined_call_operand.vmem [shape: f32[4,8], index: 4, kind: input, shape index: {}]
  %s5 = inlined_call_operand.vmem [shape: f32[1,8], index: 5, kind: input, shape index: {}]
  %s6 = inlined_call_operand.vmem [shape: f32[4,8], index: 6, kind: input, shape index: {}]
  %s7 = inlined_call_operand.vmem [shape: f32[1,8], index: 7, kind: input, shape index: {}]
  %s8 = inlined_call_operand.vmem [shape: f32[2,16,16,8], index: 8, kind: output, shape index: {}]
  %s9 = sld [smem:[#allocation0]]
  $region65: #{tpu_custom_call.1} parent=0
    _
  %s11 = ssub.s32 1, %s9
  %s12 = scalar_select 0, %s11, %s9
  loop: start=0, step=1, limit=4
  $region2: #{tpu_custom_call.1} parent=0 // loop_pre_header
    _
  $region3: #{tpu_custom_call.1} parent=0 // loop_header
    %s14 = sphi 0, %s18
    %p15 = scmp.ge.s32.totalorder %s14, 4
    %s24 = sphi 0, %s26
    %s27 = sphi 0, %s24
    %s28 = sphi 0, %s27
    %s44 = sphi 0, %s28
    %s48 = sphi 0, %s48
    %s50 = sphi 0, %s48
    %s51 = sphi 0, %s50
    %s65 = sphi 0, %s51
    %s69 = sphi 0, %s69
    %s71 = sphi 0, %s69
    %s72 = sphi 0, %s71
    %s86 = sphi 0, %s72
    %s90 = sphi 0, %s90
    %s92 = sphi 0, %s90
    %s93 = sphi 0, %s92
    %s107 = sphi 0, %s93
    %s111 = sphi 0, %s111
    %s113 = sphi 0, %s111
    %s114 = sphi 0, %s113
    %s128 = sphi 0, %s114
    %s132 = sphi 0, %s132
    %s134 = sphi 0, %s132
    %s135 = sphi 0, %s134
    %s149 = sphi 0, %s135
    %s153 = sphi 0, %s153
    %s155 = sphi 0, %s153
    %s156 = sphi 0, %s155
    %s170 = sphi 0, %s156
    %s174 = sphi 0, %s174
    %s176 = sphi 0, %s174
    %s177 = sphi 0, %s176
    %s191 = sphi 0, %s177
    %s197 = sphi 0, %s199
    %s200 = sphi 0, %s197
    %s201 = sphi 0, %s200
    %s217 = sphi 0, %s201
  $region4: #{tpu_custom_call.1} parent=0 // loop_header_branch
    %17 = sbr.rel (%p15) target = $region8
  $region5: #{tpu_custom_call.1} parent=0 // loop_body
    %s19 = ssub.s32 %s14, 1
    %s20 = ssub.s32 %s14, 2
    %s21 = sadd.s32 %s14, 1
    %s22 = ssub.s32 %s14, %s21
    %p23 = scmp.eq.s32.totalorder %s22, 0
    %s25 = sadd.s32 %s24, 1
    %s26 = scalar_select %p23, %s24, %s25
    %p29 = pneg %p23
    %p30 = scmp.eq.s32.totalorder %s14, 1
    %p31 = por %p29, %p30
    %p32 = scmp.ne.s32.totalorder %s24, %s27
    %p33 = scmp.eq.s32.totalorder %s14, 0
    %p34 = por %p32, %p33
    %p35 = scmp.ne.s32.totalorder %s24, %s27
    %p36 = scmp.eq.s32.totalorder %s19, 1
    %p37 = por %p35, %p36
    %p38 = scmp.ne.s32.totalorder %s27, %s28
    %p39 = scmp.eq.s32.totalorder %s19, 0
    %p40 = por %p38, %p39
    %p41 = scmp.ne.s32.totalorder %s27, %s28
    %p42 = scmp.eq.s32.totalorder %s20, 1
    %p43 = por %p41, %p42
    %p45 = scmp.ne.s32.totalorder %s28, %s44
    %p46 = scmp.eq.s32.totalorder %s20, 0
    %p47 = por %p45, %p46
    %s49 = sadd.s32 %s48, 1
    %p52 = scmp.eq.s32.totalorder %s14, 1
    %p53 = scmp.ne.s32.totalorder %s48, %s50
    %p54 = scmp.eq.s32.totalorder %s14, 0
    %p55 = por %p53, %p54
    %p56 = scmp.ne.s32.totalorder %s48, %s50
    %p57 = scmp.eq.s32.totalorder %s19, 1
    %p58 = por %p56, %p57
    %p59 = scmp.ne.s32.totalorder %s50, %s51
    %p60 = scmp.eq.s32.totalorder %s19, 0
    %p61 = por %p59, %p60
    %p62 = scmp.ne.s32.totalorder %s50, %s51
    %p63 = scmp.eq.s32.totalorder %s20, 1
    %p64 = por %p62, %p63
    %p66 = scmp.ne.s32.totalorder %s51, %s65
    %p67 = scmp.eq.s32.totalorder %s20, 0
    %p68 = por %p66, %p67
    %s70 = sadd.s32 %s69, 1
    %p73 = scmp.eq.s32.totalorder %s14, 1
    %p74 = scmp.ne.s32.totalorder %s69, %s71
    %p75 = scmp.eq.s32.totalorder %s14, 0
    %p76 = por %p74, %p75
    %p77 = scmp.ne.s32.totalorder %s69, %s71
    %p78 = scmp.eq.s32.totalorder %s19, 1
    %p79 = por %p77, %p78
    %p80 = scmp.ne.s32.totalorder %s71, %s72
    %p81 = scmp.eq.s32.totalorder %s19, 0
    %p82 = por %p80, %p81
    %p83 = scmp.ne.s32.totalorder %s71, %s72
    %p84 = scmp.eq.s32.totalorder %s20, 1
    %p85 = por %p83, %p84
    %p87 = scmp.ne.s32.totalorder %s72, %s86
    %p88 = scmp.eq.s32.totalorder %s20, 0
    %p89 = por %p87, %p88
    %s91 = sadd.s32 %s90, 1
    %p94 = scmp.eq.s32.totalorder %s14, 1
    %p95 = scmp.ne.s32.totalorder %s90, %s92
    %p96 = scmp.eq.s32.totalorder %s14, 0
    %p97 = por %p95, %p96
    %p98 = scmp.ne.s32.totalorder %s90, %s92
    %p99 = scmp.eq.s32.totalorder %s19, 1
    %p100 = por %p98, %p99
    %p101 = scmp.ne.s32.totalorder %s92, %s93
    %p102 = scmp.eq.s32.totalorder %s19, 0
    %p103 = por %p101, %p102
    %p104 = scmp.ne.s32.totalorder %s92, %s93
    %p105 = scmp.eq.s32.totalorder %s20, 1
    %p106 = por %p104, %p105
    %p108 = scmp.ne.s32.totalorder %s93, %s107
    %p109 = scmp.eq.s32.totalorder %s20, 0
    %p110 = por %p108, %p109
    %s112 = sadd.s32 %s111, 1
    %p115 = scmp.eq.s32.totalorder %s14, 1
    %p116 = scmp.ne.s32.totalorder %s111, %s113
    %p117 = scmp.eq.s32.totalorder %s14, 0
    %p118 = por %p116, %p117
    %p119 = scmp.ne.s32.totalorder %s111, %s113
    %p120 = scmp.eq.s32.totalorder %s19, 1
    %p121 = por %p119, %p120
    %p122 = scmp.ne.s32.totalorder %s113, %s114
    %p123 = scmp.eq.s32.totalorder %s19, 0
    %p124 = por %p122, %p123
    %p125 = scmp.ne.s32.totalorder %s113, %s114
    %p126 = scmp.eq.s32.totalorder %s20, 1
    %p127 = por %p125, %p126
    %p129 = scmp.ne.s32.totalorder %s114, %s128
    %p130 = scmp.eq.s32.totalorder %s20, 0
    %p131 = por %p129, %p130
    %s133 = sadd.s32 %s132, 1
    %p136 = scmp.eq.s32.totalorder %s14, 1
    %p137 = scmp.ne.s32.totalorder %s132, %s134
    %p138 = scmp.eq.s32.totalorder %s14, 0
    %p139 = por %p137, %p138
    %p140 = scmp.ne.s32.totalorder %s132, %s134
    %p141 = scmp.eq.s32.totalorder %s19, 1
    %p142 = por %p140, %p141
    %p143 = scmp.ne.s32.totalorder %s134, %s135
    %p144 = scmp.eq.s32.totalorder %s19, 0
    %p145 = por %p143, %p144
    %p146 = scmp.ne.s32.totalorder %s134, %s135
    %p147 = scmp.eq.s32.totalorder %s20, 1
    %p148 = por %p146, %p147
    %p150 = scmp.ne.s32.totalorder %s135, %s149
    %p151 = scmp.eq.s32.totalorder %s20, 0
    %p152 = por %p150, %p151
    %s154 = sadd.s32 %s153, 1
    %p157 = scmp.eq.s32.totalorder %s14, 1
    %p158 = scmp.ne.s32.totalorder %s153, %s155
    %p159 = scmp.eq.s32.totalorder %s14, 0
    %p160 = por %p158, %p159
    %p161 = scmp.ne.s32.totalorder %s153, %s155
    %p162 = scmp.eq.s32.totalorder %s19, 1
    %p163 = por %p161, %p162
    %p164 = scmp.ne.s32.totalorder %s155, %s156
    %p165 = scmp.eq.s32.totalorder %s19, 0
    %p166 = por %p164, %p165
    %p167 = scmp.ne.s32.totalorder %s155, %s156
    %p168 = scmp.eq.s32.totalorder %s20, 1
    %p169 = por %p167, %p168
    %p171 = scmp.ne.s32.totalorder %s156, %s170
    %p172 = scmp.eq.s32.totalorder %s20, 0
    %p173 = por %p171, %p172
    %s175 = sadd.s32 %s174, 1
    %p178 = scmp.eq.s32.totalorder %s14, 1
    %p179 = scmp.ne.s32.totalorder %s174, %s176
    %p180 = scmp.eq.s32.totalorder %s14, 0
    %p181 = por %p179, %p180
    %p182 = scmp.ne.s32.totalorder %s174, %s176
    %p183 = scmp.eq.s32.totalorder %s19, 1
    %p184 = por %p182, %p183
    %p185 = scmp.ne.s32.totalorder %s176, %s177
    %p186 = scmp.eq.s32.totalorder %s19, 0
    %p187 = por %p185, %p186
    %p188 = scmp.ne.s32.totalorder %s176, %s177
    %p189 = scmp.eq.s32.totalorder %s20, 1
    %p190 = por %p188, %p189
    %p192 = scmp.ne.s32.totalorder %s177, %s191
    %p193 = scmp.eq.s32.totalorder %s20, 0
    %p194 = por %p192, %p193
    %s195 = ssub.s32 %s14, %s21
    %p196 = scmp.eq.s32.totalorder %s195, 0
    %s198 = sadd.s32 %s197, 1
    %s199 = scalar_select %p196, %s197, %s198
    %p202 = pneg %p196
    %p203 = scmp.eq.s32.totalorder %s14, 1
    %p204 = por %p202, %p203
    %p205 = scmp.ne.s32.totalorder %s197, %s200
    %p206 = scmp.eq.s32.totalorder %s14, 0
    %p207 = por %p205, %p206
    %p208 = scmp.ne.s32.totalorder %s197, %s200
    %p209 = scmp.eq.s32.totalorder %s19, 1
    %p210 = por %p208, %p209
    %p211 = scmp.ne.s32.totalorder %s200, %s201
    %p212 = scmp.eq.s32.totalorder %s19, 0
    %p213 = por %p211, %p212
    %p214 = scmp.ne.s32.totalorder %s200, %s201
    %p215 = scmp.eq.s32.totalorder %s20, 1
    %p216 = por %p214, %p215
    %p218 = scmp.ne.s32.totalorder %s201, %s217
    %p219 = scmp.eq.s32.totalorder %s20, 0
    %p220 = por %p218, %p219
    %p221 = scmp.le.s32.totalorder 1, %s14
    %p222 = scmp.lt.s32.totalorder %s14, 3
    %p223 = pnand %p221, %p222
    %p224 = pneg %p223
    // Predicated region
    $region9: #{tpu_custom_call.1} parent=5 // pred_check
      _
    $region10: #{tpu_custom_call.1} parent=5 // pred_check_branch
      %226 = sbr.rel (%p223) target = $region12
    $region11: #{tpu_custom_call.1} parent=5 // pred_region
      %s227 = ssub.s32 %s14, 1
      // Predicated region
      $region13: #{tpu_custom_call.1} parent=11 // pred_check
        %p228 = pneg %p61
      $region14: #{tpu_custom_call.1} parent=11 // pred_check_branch
        %230 = sbr.rel (%p228) target = $region16
      $region15: #{tpu_custom_call.1} parent=11 // pred_region
        _
      $region16: #{tpu_custom_call.1} parent=11 // pred_fallthru
        _
      // Predicated region
      $region17: #{tpu_custom_call.1} parent=11 // pred_check
        %p231 = pneg %p82
      $region18: #{tpu_custom_call.1} parent=11 // pred_check_branch
        %233 = sbr.rel (%p231) target = $region20
      $region19: #{tpu_custom_call.1} parent=11 // pred_region
        _
      $region20: #{tpu_custom_call.1} parent=11 // pred_fallthru
        _
      // Predicated region
      $region21: #{tpu_custom_call.1} parent=11 // pred_check
        %p234 = pneg %p103
      $region22: #{tpu_custom_call.1} parent=11 // pred_check_branch
        %236 = sbr.rel (%p234) target = $region24
      $region23: #{tpu_custom_call.1} parent=11 // pred_region
        _
      $region24: #{tpu_custom_call.1} parent=11 // pred_fallthru
        _
      // Predicated region
      $region25: #{tpu_custom_call.1} parent=11 // pred_check
        %p237 = pneg %p124
      $region26: #{tpu_custom_call.1} parent=11 // pred_check_branch
        %239 = sbr.rel (%p237) target = $region28
      $region27: #{tpu_custom_call.1} parent=11 // pred_region
        _
      $region28: #{tpu_custom_call.1} parent=11 // pred_fallthru
        _
      // Predicated region
      $region29: #{tpu_custom_call.1} parent=11 // pred_check
        %p240 = pneg %p145
      $region30: #{tpu_custom_call.1} parent=11 // pred_check_branch
        %242 = sbr.rel (%p240) target = $region32
      $region31: #{tpu_custom_call.1} parent=11 // pred_region
        _
      $region32: #{tpu_custom_call.1} parent=11 // pred_fallthru
        _
      // Predicated region
      $region33: #{tpu_custom_call.1} parent=11 // pred_check
        %p243 = pneg %p166
      $region34: #{tpu_custom_call.1} parent=11 // pred_check_branch
        %245 = sbr.rel (%p243) target = $region36
      $region35: #{tpu_custom_call.1} parent=11 // pred_region
        _
      $region36: #{tpu_custom_call.1} parent=11 // pred_fallthru
        _
      // Predicated region
      $region37: #{tpu_custom_call.1} parent=11 // pred_check
        %p246 = pneg %p187
      $region38: #{tpu_custom_call.1} parent=11 // pred_check_branch
        %248 = sbr.rel (%p246) target = $region40
      $region39: #{tpu_custom_call.1} parent=11 // pred_region
        _
      $region40: #{tpu_custom_call.1} parent=11 // pred_fallthru
        _
    $region12: #{tpu_custom_call.1} parent=5 // pred_fallthru
      _
    %p249 = scmp.lt.s32.totalorder %s14, 2
    // Predicated region
    $region41: #{tpu_custom_call.1} parent=5 // pred_check
      %p250 = pneg %p249
    $region42: #{tpu_custom_call.1} parent=5 // pred_check_branch
      %252 = sbr.rel (%p250) target = $region44
    $region43: #{tpu_custom_call.1} parent=5 // pred_region
      // Predicated region
      $region45: #{tpu_custom_call.1} parent=43 // pred_check
        %p253 = pneg %p34
      $region46: #{tpu_custom_call.1} parent=43 // pred_check_branch
        %255 = sbr.rel (%p253) target = $region48
      $region47: #{tpu_custom_call.1} parent=43 // pred_region
        %p256 = scmp.lt.s32.totalorder %s14, 1
        %s257 = scalar_select %p256, %s14, 1
        %s258 = smul.addr %s257, 32
        %s259 = smul.addr %s258, 8
        %s260 = scalar_lea.vmem %s0, %s259
      $region48: #{tpu_custom_call.1} parent=43 // pred_fallthru
        _
    $region44: #{tpu_custom_call.1} parent=5 // pred_fallthru
      _
    %p261 = scmp.le.s32.totalorder 1, %s14
    %p262 = scmp.lt.s32.totalorder %s14, 3
    %p263 = pnand %p261, %p262
    %p264 = pneg %p263
    // Predicated region
    $region49: #{tpu_custom_call.1} parent=5 // pred_check
      _
    $region50: #{tpu_custom_call.1} parent=5 // pred_check_branch
      %266 = sbr.rel (%p263) target = $region52
    $region51: #{tpu_custom_call.1} parent=5 // pred_region
      %s267 = ssub.s32 %s14, 1
      %p268 = scmp.lt.s32.totalorder %s19, 1
      %s269 = scalar_select %p268, %s19, 1
      %s270 = smul.addr %s269, 32
      %s271 = smul.addr %s270, 8
      %s272 = scalar_lea.vmem %s0, %s271
      %p273 = pneg %p40
      %p274 = pneg %p37
      %p275 = pneg %p61
      %p276 = pneg %p58
      %p277 = pneg %p82
      %p278 = pneg %p79
      %p279 = pneg %p103
      %p280 = pneg %p100
      %p281 = pneg %p124
      %p282 = pneg %p121
      %p283 = pneg %p145
      %p284 = pneg %p142
      %p285 = pneg %p166
      %p286 = pneg %p163
      %p287 = pneg %p187
      %p288 = pneg %p184
      %p289 = pneg %p213
      %p290 = pneg %p210
      %p291 = scmp.lt.s32.totalorder %s19, 1
      %s292 = scalar_select %p291, %s19, 1
      %s293 = smul.addr %s292, 32
      %s294 = smul.addr %s293, 8
      %s295 = scalar_lea.vmem %s8, %s294
      %p296 = scmp.lt.s32.totalorder %s19, 1
      %s297 = scalar_select %p296, %s19, 1
      %s298 = smul.addr %s297, 32
      %s299 = smul.addr %s298, 8
      %s300 = scalar_lea.vmem %s0, %s299
      %p301 = scmp.lt.s32.totalorder %s19, 1
      %s302 = scalar_select %p301, %s19, 1
      %s303 = smul.addr %s302, 32
      %s304 = smul.addr %s303, 8
      %s305 = scalar_lea.vmem %s8, %s304
      %vm307 = vcmask 64512
      %308 = vst.msk [vmem:[#allocation2] sm:$0xff] %vm307, 0.0
      %309 = vst.msk [vmem:[#allocation2 + $0x8] sm:$0xff] %vm307, 0.0
      %310 = vst.msk [vmem:[#allocation2 + $0x10] sm:$0xff] %vm307, 0.0
      %311 = vst.msk [vmem:[#allocation2 + $0x18] sm:$0xff] %vm307, 0.0
      %312 = vst.msk [vmem:[#allocation2 + $0x20] sm:$0xff] %vm307, 0.0
      %313 = vst.msk [vmem:[#allocation2 + $0x28] sm:$0xff] %vm307, 0.0
      %314 = vst.msk [vmem:[#allocation2 + $0x30] sm:$0xff] %vm307, 0.0
      %315 = vst.msk [vmem:[#allocation2 + $0x38] sm:$0xff] %vm307, 0.0
      %316 = vst.msk [vmem:[#allocation2 + $0x40] sm:$0xff] %vm307, 0.0
      %317 = vst.msk [vmem:[#allocation2 + $0x48] sm:$0xff] %vm307, 0.0
      %318 = vst.msk [vmem:[#allocation2 + $0x50] sm:$0xff] %vm307, 0.0
      %319 = vst.msk [vmem:[#allocation2 + $0x58] sm:$0xff] %vm307, 0.0
      %320 = vst.msk [vmem:[#allocation2 + $0x60] sm:$0xff] %vm307, 0.0
      %321 = vst.msk [vmem:[#allocation2 + $0x68] sm:$0xff] %vm307, 0.0
      %322 = vst.msk [vmem:[#allocation2 + $0x70] sm:$0xff] %vm307, 0.0
      %323 = vst.msk [vmem:[#allocation2 + $0x78] sm:$0xff] %vm307, 0.0
      %324 = vst.msk [vmem:[#allocation2 + $0x80] sm:$0xff] %vm307, 0.0
      %325 = vst.msk [vmem:[#allocation2 + $0x88] sm:$0xff] %vm307, 0.0
      %326 = vst.msk [vmem:[#allocation2 + $0x90] sm:$0xff] %vm307, 0.0
      %327 = vst.msk [vmem:[#allocation2 + $0x98] sm:$0xff] %vm307, 0.0
      %328 = vst.msk [vmem:[#allocation2 + $0xa0] sm:$0xff] %vm307, 0.0
      %329 = vst.msk [vmem:[#allocation2 + $0xa8] sm:$0xff] %vm307, 0.0
      %330 = vst.msk [vmem:[#allocation2 + $0xb0] sm:$0xff] %vm307, 0.0
      %331 = vst.msk [vmem:[#allocation2 + $0xb8] sm:$0xff] %vm307, 0.0
      %332 = vst.msk [vmem:[#allocation2 + $0xc0] sm:$0xff] %vm307, 0.0
      %333 = vst.msk [vmem:[#allocation2 + $0xc8] sm:$0xff] %vm307, 0.0
      %334 = vst.msk [vmem:[#allocation2 + $0xd0] sm:$0xff] %vm307, 0.0
      %335 = vst.msk [vmem:[#allocation2 + $0xd8] sm:$0xff] %vm307, 0.0
      %336 = vst.msk [vmem:[#allocation2 + $0xe0] sm:$0xff] %vm307, 0.0
      %337 = vst.msk [vmem:[#allocation2 + $0xe8] sm:$0xff] %vm307, 0.0
      %338 = vst.msk [vmem:[#allocation2 + $0xf0] sm:$0xff] %vm307, 0.0
      %339 = vst.msk [vmem:[#allocation2 + $0xf8] sm:$0xff] %vm307, 0.0
      %340 = vst.msk [vmem:[#allocation2 + $0x100] sm:$0xff] %vm307, 0.0
      %341 = vst.msk [vmem:[#allocation2 + $0x108] sm:$0xff] %vm307, 0.0
      %342 = vst.msk [vmem:[#allocation2 + $0x110] sm:$0xff] %vm307, 0.0
      %343 = vst.msk [vmem:[#allocation2 + $0x118] sm:$0xff] %vm307, 0.0
      %344 = vst.msk [vmem:[#allocation2 + $0x120] sm:$0xff] %vm307, 0.0
      %345 = vst.msk [vmem:[#allocation2 + $0x128] sm:$0xff] %vm307, 0.0
      %346 = vst.msk [vmem:[#allocation2 + $0x130] sm:$0xff] %vm307, 0.0
      %347 = vst.msk [vmem:[#allocation2 + $0x138] sm:$0xff] %vm307, 0.0
      %348 = vst.msk [vmem:[#allocation2 + $0x140] sm:$0xff] %vm307, 0.0
      %349 = vst.msk [vmem:[#allocation2 + $0x148] sm:$0xff] %vm307, 0.0
      %350 = vst.msk [vmem:[#allocation2 + $0x150] sm:$0xff] %vm307, 0.0
      %351 = vst.msk [vmem:[#allocation2 + $0x158] sm:$0xff] %vm307, 0.0
      %352 = vst.msk [vmem:[#allocation2 + $0x160] sm:$0xff] %vm307, 0.0
      %353 = vst.msk [vmem:[#allocation2 + $0x168] sm:$0xff] %vm307, 0.0
      %354 = vst.msk [vmem:[#allocation2 + $0x170] sm:$0xff] %vm307, 0.0
      %355 = vst.msk [vmem:[#allocation2 + $0x178] sm:$0xff] %vm307, 0.0
      %356 = vst.msk [vmem:[#allocation2 + $0x180] sm:$0xff] %vm307, 0.0
      %357 = vst.msk [vmem:[#allocation2 + $0x188] sm:$0xff] %vm307, 0.0
      %358 = vst.msk [vmem:[#allocation2 + $0x190] sm:$0xff] %vm307, 0.0
      %359 = vst.msk [vmem:[#allocation2 + $0x198] sm:$0xff] %vm307, 0.0
      %360 = vst.msk [vmem:[#allocation2 + $0x1a0] sm:$0xff] %vm307, 0.0
      %361 = vst.msk [vmem:[#allocation2 + $0x1a8] sm:$0xff] %vm307, 0.0
      %362 = vst.msk [vmem:[#allocation2 + $0x1b0] sm:$0xff] %vm307, 0.0
      %363 = vst.msk [vmem:[#allocation2 + $0x1b8] sm:$0xff] %vm307, 0.0
      %364 = vst.msk [vmem:[#allocation2 + $0x1c0] sm:$0xff] %vm307, 0.0
      %365 = vst.msk [vmem:[#allocation2 + $0x1c8] sm:$0xff] %vm307, 0.0
      %366 = vst.msk [vmem:[#allocation2 + $0x1d0] sm:$0xff] %vm307, 0.0
      %367 = vst.msk [vmem:[#allocation2 + $0x1d8] sm:$0xff] %vm307, 0.0
      %368 = vst.msk [vmem:[#allocation2 + $0x1e0] sm:$0xff] %vm307, 0.0
      %369 = vst.msk [vmem:[#allocation2 + $0x1e8] sm:$0xff] %vm307, 0.0
      %370 = vst.msk [vmem:[#allocation2 + $0x1f0] sm:$0xff] %vm307, 0.0
      %371 = vst.msk [vmem:[#allocation2 + $0x1f8] sm:$0xff] %vm307, 0.0
      %372 = vst.msk [vmem:[#allocation2 + $0x200] sm:$0xff] %vm307, 0.0
      %373 = vst.msk [vmem:[#allocation2 + $0x208] sm:$0xff] %vm307, 0.0
      %374 = vst.msk [vmem:[#allocation2 + $0x210] sm:$0xff] %vm307, 0.0
      %375 = vst.msk [vmem:[#allocation2 + $0x218] sm:$0xff] %vm307, 0.0
      %376 = vst.msk [vmem:[#allocation2 + $0x220] sm:$0xff] %vm307, 0.0
      %377 = vst.msk [vmem:[#allocation2 + $0x228] sm:$0xff] %vm307, 0.0
      %378 = vst.msk [vmem:[#allocation2 + $0x230] sm:$0xff] %vm307, 0.0
      %379 = vst.msk [vmem:[#allocation2 + $0x238] sm:$0xff] %vm307, 0.0
      %v380 = vld [vmem:[%s300] sm:$0xff]
      %v381 = vld [vmem:[%s300 + $0x8] sm:$0xff]
      %v382 = vld [vmem:[%s300 + $0x10] sm:$0xff]
      %v383 = vld [vmem:[%s300 + $0x18] sm:$0xff]
      %v384 = vld [vmem:[%s300 + $0x20] sm:$0xff]
      %v385 = vld [vmem:[%s300 + $0x28] sm:$0xff]
      %v386 = vld [vmem:[%s300 + $0x30] sm:$0xff]
      %v387 = vld [vmem:[%s300 + $0x38] sm:$0xff]
      %v388 = vld [vmem:[%s300 + $0x40] sm:$0xff]
      %v389 = vld [vmem:[%s300 + $0x48] sm:$0xff]
      %v390 = vld [vmem:[%s300 + $0x50] sm:$0xff]
      %v391 = vld [vmem:[%s300 + $0x58] sm:$0xff]
      %v392 = vld [vmem:[%s300 + $0x60] sm:$0xff]
      %v393 = vld [vmem:[%s300 + $0x68] sm:$0xff]
      %v394 = vld [vmem:[%s300 + $0x70] sm:$0xff]
      %v395 = vld [vmem:[%s300 + $0x78] sm:$0xff]
      %v396 = vld [vmem:[%s300 + $0x80] sm:$0xff]
      %v397 = vld [vmem:[%s300 + $0x88] sm:$0xff]
      %v398 = vld [vmem:[%s300 + $0x90] sm:$0xff]
      %v399 = vld [vmem:[%s300 + $0x98] sm:$0xff]
      %v400 = vld [vmem:[%s300 + $0xa0] sm:$0xff]
      %v401 = vld [vmem:[%s300 + $0xa8] sm:$0xff]
      %v402 = vld [vmem:[%s300 + $0xb0] sm:$0xff]
      %v403 = vld [vmem:[%s300 + $0xb8] sm:$0xff]
      %v404 = vld [vmem:[%s300 + $0xc0] sm:$0xff]
      %v405 = vld [vmem:[%s300 + $0xc8] sm:$0xff]
      %v406 = vld [vmem:[%s300 + $0xd0] sm:$0xff]
      %v407 = vld [vmem:[%s300 + $0xd8] sm:$0xff]
      %v408 = vld [vmem:[%s300 + $0xe0] sm:$0xff]
      %v409 = vld [vmem:[%s300 + $0xe8] sm:$0xff]
      %v410 = vld [vmem:[%s300 + $0xf0] sm:$0xff]
      %v411 = vld [vmem:[%s300 + $0xf8] sm:$0xff]
      %s412 = scalar_lea.vmem [#allocation2], 32
      %413 = vst.msk [vmem:[%s412 + $0x8] sm:$0xff] %vm307, %v380
      %414 = vst.msk [vmem:[%s412 + $0x10] sm:$0xff] %vm307, %v381
      %415 = vst.msk [vmem:[%s412 + $0x28] sm:$0xff] %vm307, %v382
      %416 = vst.msk [vmem:[%s412 + $0x30] sm:$0xff] %vm307, %v383
      %417 = vst.msk [vmem:[%s412 + $0x48] sm:$0xff] %vm307, %v384
      %418 = vst.msk [vmem:[%s412 + $0x50] sm:$0xff] %vm307, %v385
      %419 = vst.msk [vmem:[%s412 + $0x68] sm:$0xff] %vm307, %v386
      %420 = vst.msk [vmem:[%s412 + $0x70] sm:$0xff] %vm307, %v387
      %421 = vst.msk [vmem:[%s412 + $0x88] sm:$0xff] %vm307, %v388
      %422 = vst.msk [vmem:[%s412 + $0x90] sm:$0xff] %vm307, %v389
      %423 = vst.msk [vmem:[%s412 + $0xa8] sm:$0xff] %vm307, %v390
      %424 = vst.msk [vmem:[%s412 + $0xb0] sm:$0xff] %vm307, %v391
      %425 = vst.msk [vmem:[%s412 + $0xc8] sm:$0xff] %vm307, %v392
      %426 = vst.msk [vmem:[%s412 + $0xd0] sm:$0xff] %vm307, %v393
      %427 = vst.msk [vmem:[%s412 + $0xe8] sm:$0xff] %vm307, %v394
      %428 = vst.msk [vmem:[%s412 + $0xf0] sm:$0xff] %vm307, %v395
      %429 = vst.msk [vmem:[%s412 + $0x108] sm:$0xff] %vm307, %v396
      %430 = vst.msk [vmem:[%s412 + $0x110] sm:$0xff] %vm307, %v397
      %431 = vst.msk [vmem:[%s412 + $0x128] sm:$0xff] %vm307, %v398
      %432 = vst.msk [vmem:[%s412 + $0x130] sm:$0xff] %vm307, %v399
      %433 = vst.msk [vmem:[%s412 + $0x148] sm:$0xff] %vm307, %v400
      %434 = vst.msk [vmem:[%s412 + $0x150] sm:$0xff] %vm307, %v401
      %435 = vst.msk [vmem:[%s412 + $0x168] sm:$0xff] %vm307, %v402
      %436 = vst.msk [vmem:[%s412 + $0x170] sm:$0xff] %vm307, %v403
      %437 = vst.msk [vmem:[%s412 + $0x188] sm:$0xff] %vm307, %v404
      %438 = vst.msk [vmem:[%s412 + $0x190] sm:$0xff] %vm307, %v405
      %439 = vst.msk [vmem:[%s412 + $0x1a8] sm:$0xff] %vm307, %v406
      %440 = vst.msk [vmem:[%s412 + $0x1b0] sm:$0xff] %vm307, %v407
      %441 = vst.msk [vmem:[%s412 + $0x1c8] sm:$0xff] %vm307, %v408
      %442 = vst.msk [vmem:[%s412 + $0x1d0] sm:$0xff] %vm307, %v409
      %443 = vst.msk [vmem:[%s412 + $0x1e8] sm:$0xff] %vm307, %v410
      %444 = vst.msk [vmem:[%s412 + $0x1f0] sm:$0xff] %vm307, %v411
      %v445 = vld [vmem:[#allocation2 + $0x7] sm:$0xff]
      %v446 = vld [vmem:[#allocation2 + $0xf] sm:$0xff]
      %v447 = vld [vmem:[#allocation2 + $0x27] sm:$0xff]
      %v448 = vld [vmem:[#allocation2 + $0x2f] sm:$0xff]
      %v449 = vld [vmem:[#allocation2 + $0x47] sm:$0xff]
      %v450 = vld [vmem:[#allocation2 + $0x4f] sm:$0xff]
      %v451 = vld [vmem:[#allocation2 + $0x67] sm:$0xff]
      %v452 = vld [vmem:[#allocation2 + $0x6f] sm:$0xff]
      %v453 = vld [vmem:[#allocation2 + $0x87] sm:$0xff]
      %v454 = vld [vmem:[#allocation2 + $0x8f] sm:$0xff]
      %v455 = vld [vmem:[#allocation2 + $0xa7] sm:$0xff]
      %v456 = vld [vmem:[#allocation2 + $0xaf] sm:$0xff]
      %v457 = vld [vmem:[#allocation2 + $0xc7] sm:$0xff]
      %v458 = vld [vmem:[#allocation2 + $0xcf] sm:$0xff]
      %v459 = vld [vmem:[#allocation2 + $0xe7] sm:$0xff]
      %v460 = vld [vmem:[#allocation2 + $0xef] sm:$0xff]
      %v461 = vld [vmem:[#allocation2 + $0x107] sm:$0xff]
      %v462 = vld [vmem:[#allocation2 + $0x10f] sm:$0xff]
      %v463 = vld [vmem:[#allocation2 + $0x127] sm:$0xff]
      %v464 = vld [vmem:[#allocation2 + $0x12f] sm:$0xff]
      %v465 = vld [vmem:[#allocation2 + $0x147] sm:$0xff]
      %v466 = vld [vmem:[#allocation2 + $0x14f] sm:$0xff]
      %v467 = vld [vmem:[#allocation2 + $0x167] sm:$0xff]
      %v468 = vld [vmem:[#allocation2 + $0x16f] sm:$0xff]
      %v469 = vld [vmem:[#allocation2 + $0x187] sm:$0xff]
      %v470 = vld [vmem:[#allocation2 + $0x18f] sm:$0xff]
      %v471 = vld [vmem:[#allocation2 + $0x1a7] sm:$0xff]
      %v472 = vld [vmem:[#allocation2 + $0x1af] sm:$0xff]
      %v473 = vld [vmem:[#allocation2 + $0x1c7] sm:$0xff]
      %v474 = vld [vmem:[#allocation2 + $0x1cf] sm:$0xff]
      %v475 = vld [vmem:[#allocation2 + $0x1e7] sm:$0xff]
      %v476 = vld [vmem:[#allocation2 + $0x1ef] sm:$0xff]
      %v477 = vld [vmem:[#allocation2 + $0x207] sm:$0xff]
      %v478 = vld [vmem:[#allocation2 + $0x20f] sm:$0xff]
      %v479 = vld [vmem:[#allocation2 + $0x227] sm:$0xff]
      %v480 = vld [vmem:[#allocation2 + $0x22f] sm:$0xff]
      %v481 = vld [vmem:[#allocation2 + $0x8] sm:$0xff]
      %v482 = vld [vmem:[#allocation2 + $0x10] sm:$0xff]
      %v483 = vld [vmem:[#allocation2 + $0x28] sm:$0xff]
      %v484 = vld [vmem:[#allocation2 + $0x30] sm:$0xff]
      %v485 = vld [vmem:[#allocation2 + $0x48] sm:$0xff]
      %v486 = vld [vmem:[#allocation2 + $0x50] sm:$0xff]
      %v487 = vld [vmem:[#allocation2 + $0x68] sm:$0xff]
      %v488 = vld [vmem:[#allocation2 + $0x70] sm:$0xff]
      %v489 = vld [vmem:[#allocation2 + $0x88] sm:$0xff]
      %v490 = vld [vmem:[#allocation2 + $0x90] sm:$0xff]
      %v491 = vld [vmem:[#allocation2 + $0xa8] sm:$0xff]
      %v492 = vld [vmem:[#allocation2 + $0xb0] sm:$0xff]
      %v493 = vld [vmem:[#allocation2 + $0xc8] sm:$0xff]
      %v494 = vld [vmem:[#allocation2 + $0xd0] sm:$0xff]
      %v495 = vld [vmem:[#allocation2 + $0xe8] sm:$0xff]
      %v496 = vld [vmem:[#allocation2 + $0xf0] sm:$0xff]
      %v497 = vld [vmem:[#allocation2 + $0x108] sm:$0xff]
      %v498 = vld [vmem:[#allocation2 + $0x110] sm:$0xff]
      %v499 = vld [vmem:[#allocation2 + $0x128] sm:$0xff]
      %v500 = vld [vmem:[#allocation2 + $0x130] sm:$0xff]
      %v501 = vld [vmem:[#allocation2 + $0x148] sm:$0xff]
      %v502 = vld [vmem:[#allocation2 + $0x150] sm:$0xff]
      %v503 = vld [vmem:[#allocation2 + $0x168] sm:$0xff]
      %v504 = vld [vmem:[#allocation2 + $0x170] sm:$0xff]
      %v505 = vld [vmem:[#allocation2 + $0x188] sm:$0xff]
      %v506 = vld [vmem:[#allocation2 + $0x190] sm:$0xff]
      %v507 = vld [vmem:[#allocation2 + $0x1a8] sm:$0xff]
      %v508 = vld [vmem:[#allocation2 + $0x1b0] sm:$0xff]
      %v509 = vld [vmem:[#allocation2 + $0x1c8] sm:$0xff]
      %v510 = vld [vmem:[#allocation2 + $0x1d0] sm:$0xff]
      %v511 = vld [vmem:[#allocation2 + $0x1e8] sm:$0xff]
      %v512 = vld [vmem:[#allocation2 + $0x1f0] sm:$0xff]
      %v513 = vld [vmem:[#allocation2 + $0x208] sm:$0xff]
      %v514 = vld [vmem:[#allocation2 + $0x210] sm:$0xff]
      %v515 = vld [vmem:[#allocation2 + $0x228] sm:$0xff]
      %v516 = vld [vmem:[#allocation2 + $0x230] sm:$0xff]
      %v517 = vld [vmem:[#allocation2 + $0x9] sm:$0xff]
      %v518 = vld [vmem:[#allocation2 + $0x11] sm:$0xff]
      %v519 = vld [vmem:[#allocation2 + $0x29] sm:$0xff]
      %v520 = vld [vmem:[#allocation2 + $0x31] sm:$0xff]
      %v521 = vld [vmem:[#allocation2 + $0x49] sm:$0xff]
      %v522 = vld [vmem:[#allocation2 + $0x51] sm:$0xff]
      %v523 = vld [vmem:[#allocation2 + $0x69] sm:$0xff]
      %v524 = vld [vmem:[#allocation2 + $0x71] sm:$0xff]
      %v525 = vld [vmem:[#allocation2 + $0x89] sm:$0xff]
      %v526 = vld [vmem:[#allocation2 + $0x91] sm:$0xff]
      %v527 = vld [vmem:[#allocation2 + $0xa9] sm:$0xff]
      %v528 = vld [vmem:[#allocation2 + $0xb1] sm:$0xff]
      %v529 = vld [vmem:[#allocation2 + $0xc9] sm:$0xff]
      %v530 = vld [vmem:[#allocation2 + $0xd1] sm:$0xff]
      %v531 = vld [vmem:[#allocation2 + $0xe9] sm:$0xff]
      %v532 = vld [vmem:[#allocation2 + $0xf1] sm:$0xff]
      %v533 = vld [vmem:[#allocation2 + $0x109] sm:$0xff]
      %v534 = vld [vmem:[#allocation2 + $0x111] sm:$0xff]
      %v535 = vld [vmem:[#allocation2 + $0x129] sm:$0xff]
      %v536 = vld [vmem:[#allocation2 + $0x131] sm:$0xff]
      %v537 = vld [vmem:[#allocation2 + $0x149] sm:$0xff]
      %v538 = vld [vmem:[#allocation2 + $0x151] sm:$0xff]
      %v539 = vld [vmem:[#allocation2 + $0x169] sm:$0xff]
      %v540 = vld [vmem:[#allocation2 + $0x171] sm:$0xff]
      %v541 = vld [vmem:[#allocation2 + $0x189] sm:$0xff]
      %v542 = vld [vmem:[#allocation2 + $0x191] sm:$0xff]
      %v543 = vld [vmem:[#allocation2 + $0x1a9] sm:$0xff]
      %v544 = vld [vmem:[#allocation2 + $0x1b1] sm:$0xff]
      %v545 = vld [vmem:[#allocation2 + $0x1c9] sm:$0xff]
      %v546 = vld [vmem:[#allocation2 + $0x1d1] sm:$0xff]
      %v547 = vld [vmem:[#allocation2 + $0x1e9] sm:$0xff]
      %v548 = vld [vmem:[#allocation2 + $0x1f1] sm:$0xff]
      %v549 = vld [vmem:[#allocation2 + $0x209] sm:$0xff]
      %v550 = vld [vmem:[#allocation2 + $0x211] sm:$0xff]
      %v551 = vld [vmem:[#allocation2 + $0x229] sm:$0xff]
      %v552 = vld [vmem:[#allocation2 + $0x231] sm:$0xff]
      %589 = vrot.lane.b32.xlu0 %v481, 8
      %v590 = vpop.permute.xlu0 %589
      %591 = vrot.lane.b32.xlu0 %v482, 8
      %v592 = vpop.permute.xlu0 %591
      %593 = vrot.lane.b32.xlu0 %v483, 8
      %v594 = vpop.permute.xlu0 %593
      %595 = vrot.lane.b32.xlu0 %v484, 8
      %v596 = vpop.permute.xlu0 %595
      %597 = vrot.lane.b32.xlu0 %v485, 8
      %v598 = vpop.permute.xlu0 %597
      %599 = vrot.lane.b32.xlu0 %v486, 8
      %v600 = vpop.permute.xlu0 %599
      %601 = vrot.lane.b32.xlu0 %v487, 8
      %v602 = vpop.permute.xlu0 %601
      %603 = vrot.lane.b32.xlu0 %v488, 8
      %v604 = vpop.permute.xlu0 %603
      %605 = vrot.lane.b32.xlu0 %v489, 8
      %v606 = vpop.permute.xlu0 %605
      %607 = vrot.lane.b32.xlu0 %v490, 8
      %v608 = vpop.permute.xlu0 %607
      %609 = vrot.lane.b32.xlu0 %v491, 8
      %v610 = vpop.permute.xlu0 %609
      %611 = vrot.lane.b32.xlu0 %v492, 8
      %v612 = vpop.permute.xlu0 %611
      %613 = vrot.lane.b32.xlu0 %v493, 8
      %v614 = vpop.permute.xlu0 %613
      %615 = vrot.lane.b32.xlu0 %v494, 8
      %v616 = vpop.permute.xlu0 %615
      %617 = vrot.lane.b32.xlu0 %v495, 8
      %v618 = vpop.permute.xlu0 %617
      %619 = vrot.lane.b32.xlu0 %v496, 8
      %v620 = vpop.permute.xlu0 %619
      %621 = vrot.lane.b32.xlu0 %v497, 8
      %v622 = vpop.permute.xlu0 %621
      %623 = vrot.lane.b32.xlu0 %v498, 8
      %v624 = vpop.permute.xlu0 %623
      %625 = vrot.lane.b32.xlu0 %v499, 8
      %v626 = vpop.permute.xlu0 %625
      %627 = vrot.lane.b32.xlu0 %v500, 8
      %v628 = vpop.permute.xlu0 %627
      %629 = vrot.lane.b32.xlu0 %v501, 8
      %v630 = vpop.permute.xlu0 %629
      %631 = vrot.lane.b32.xlu0 %v502, 8
      %v632 = vpop.permute.xlu0 %631
      %633 = vrot.lane.b32.xlu0 %v503, 8
      %v634 = vpop.permute.xlu0 %633
      %635 = vrot.lane.b32.xlu0 %v504, 8
      %v636 = vpop.permute.xlu0 %635
      %637 = vrot.lane.b32.xlu0 %v505, 8
      %v638 = vpop.permute.xlu0 %637
      %639 = vrot.lane.b32.xlu0 %v506, 8
      %v640 = vpop.permute.xlu0 %639
      %641 = vrot.lane.b32.xlu0 %v507, 8
      %v642 = vpop.permute.xlu0 %641
      %643 = vrot.lane.b32.xlu0 %v508, 8
      %v644 = vpop.permute.xlu0 %643
      %645 = vrot.lane.b32.xlu0 %v509, 8
      %v646 = vpop.permute.xlu0 %645
      %647 = vrot.lane.b32.xlu0 %v510, 8
      %v648 = vpop.permute.xlu0 %647
      %649 = vrot.lane.b32.xlu0 %v511, 8
      %v650 = vpop.permute.xlu0 %649
      %651 = vrot.lane.b32.xlu0 %v512, 8
      %v652 = vpop.permute.xlu0 %651
      %653 = vrot.lane.b32.xlu0 %v513, 8
      %v654 = vpop.permute.xlu0 %653
      %655 = vrot.lane.b32.xlu0 %v514, 8
      %v656 = vpop.permute.xlu0 %655
      %657 = vrot.lane.b32.xlu0 %v515, 8
      %v658 = vpop.permute.xlu0 %657
      %659 = vrot.lane.b32.xlu0 %v516, 8
      %v660 = vpop.permute.xlu0 %659
      %733 = vrot.lane.b32.xlu0 %v517, 16
      %v734 = vpop.permute.xlu0 %733
      %735 = vrot.lane.b32.xlu0 %v518, 16
      %v736 = vpop.permute.xlu0 %735
      %737 = vrot.lane.b32.xlu0 %v519, 16
      %v738 = vpop.permute.xlu0 %737
      %739 = vrot.lane.b32.xlu0 %v520, 16
      %v740 = vpop.permute.xlu0 %739
      %741 = vrot.lane.b32.xlu0 %v521, 16
      %v742 = vpop.permute.xlu0 %741
      %743 = vrot.lane.b32.xlu0 %v522, 16
      %v744 = vpop.permute.xlu0 %743
      %745 = vrot.lane.b32.xlu0 %v523, 16
      %v746 = vpop.permute.xlu0 %745
      %747 = vrot.lane.b32.xlu0 %v524, 16
      %v748 = vpop.permute.xlu0 %747
      %749 = vrot.lane.b32.xlu0 %v525, 16
      %v750 = vpop.permute.xlu0 %749
      %751 = vrot.lane.b32.xlu0 %v526, 16
      %v752 = vpop.permute.xlu0 %751
      %753 = vrot.lane.b32.xlu0 %v527, 16
      %v754 = vpop.permute.xlu0 %753
      %755 = vrot.lane.b32.xlu0 %v528, 16
      %v756 = vpop.permute.xlu0 %755
      %757 = vrot.lane.b32.xlu0 %v529, 16
      %v758 = vpop.permute.xlu0 %757
      %759 = vrot.lane.b32.xlu0 %v530, 16
      %v760 = vpop.permute.xlu0 %759
      %761 = vrot.lane.b32.xlu0 %v531, 16
      %v762 = vpop.permute.xlu0 %761
      %763 = vrot.lane.b32.xlu0 %v532, 16
      %v764 = vpop.permute.xlu0 %763
      %765 = vrot.lane.b32.xlu0 %v533, 16
      %v766 = vpop.permute.xlu0 %765
      %767 = vrot.lane.b32.xlu0 %v534, 16
      %v768 = vpop.permute.xlu0 %767
      %769 = vrot.lane.b32.xlu0 %v535, 16
      %v770 = vpop.permute.xlu0 %769
      %771 = vrot.lane.b32.xlu0 %v536, 16
      %v772 = vpop.permute.xlu0 %771
      %773 = vrot.lane.b32.xlu0 %v537, 16
      %v774 = vpop.permute.xlu0 %773
      %775 = vrot.lane.b32.xlu0 %v538, 16
      %v776 = vpop.permute.xlu0 %775
      %777 = vrot.lane.b32.xlu0 %v539, 16
      %v778 = vpop.permute.xlu0 %777
      %779 = vrot.lane.b32.xlu0 %v540, 16
      %v780 = vpop.permute.xlu0 %779
      %781 = vrot.lane.b32.xlu0 %v541, 16
      %v782 = vpop.permute.xlu0 %781
      %783 = vrot.lane.b32.xlu0 %v542, 16
      %v784 = vpop.permute.xlu0 %783
      %785 = vrot.lane.b32.xlu0 %v543, 16
      %v786 = vpop.permute.xlu0 %785
      %787 = vrot.lane.b32.xlu0 %v544, 16
      %v788 = vpop.permute.xlu0 %787
      %789 = vrot.lane.b32.xlu0 %v545, 16
      %v790 = vpop.permute.xlu0 %789
      %791 = vrot.lane.b32.xlu0 %v546, 16
      %v792 = vpop.permute.xlu0 %791
      %793 = vrot.lane.b32.xlu0 %v547, 16
      %v794 = vpop.permute.xlu0 %793
      %795 = vrot.lane.b32.xlu0 %v548, 16
      %v796 = vpop.permute.xlu0 %795
      %797 = vrot.lane.b32.xlu0 %v549, 16
      %v798 = vpop.permute.xlu0 %797
      %799 = vrot.lane.b32.xlu0 %v550, 16
      %v800 = vpop.permute.xlu0 %799
      %801 = vrot.lane.b32.xlu0 %v551, 16
      %v802 = vpop.permute.xlu0 %801
      %803 = vrot.lane.b32.xlu0 %v552, 16
      %v804 = vpop.permute.xlu0 %803
      %v841 = vsel %vm307, %v445, %v590
      %v842 = vsel %vm307, %v446, %v592
      %v843 = vsel %vm307, %v447, %v594
      %v844 = vsel %vm307, %v448, %v596
      %v845 = vsel %vm307, %v449, %v598
      %v846 = vsel %vm307, %v450, %v600
      %v847 = vsel %vm307, %v451, %v602
      %v848 = vsel %vm307, %v452, %v604
      %v849 = vsel %vm307, %v453, %v606
      %v850 = vsel %vm307, %v454, %v608
      %v851 = vsel %vm307, %v455, %v610
      %v852 = vsel %vm307, %v456, %v612
      %v853 = vsel %vm307, %v457, %v614
      %v854 = vsel %vm307, %v458, %v616
      %v855 = vsel %vm307, %v459, %v618
      %v856 = vsel %vm307, %v460, %v620
      %v857 = vsel %vm307, %v461, %v622
      %v858 = vsel %vm307, %v462, %v624
      %v859 = vsel %vm307, %v463, %v626
      %v860 = vsel %vm307, %v464, %v628
      %v861 = vsel %vm307, %v465, %v630
      %v862 = vsel %vm307, %v466, %v632
      %v863 = vsel %vm307, %v467, %v634
      %v864 = vsel %vm307, %v468, %v636
      %v865 = vsel %vm307, %v469, %v638
      %v866 = vsel %vm307, %v470, %v640
      %v867 = vsel %vm307, %v471, %v642
      %v868 = vsel %vm307, %v472, %v644
      %v869 = vsel %vm307, %v473, %v646
      %v870 = vsel %vm307, %v474, %v648
      %v871 = vsel %vm307, %v475, %v650
      %v872 = vsel %vm307, %v476, %v652
      %v873 = vsel %vm307, %v477, %v654
      %v874 = vsel %vm307, %v478, %v656
      %v875 = vsel %vm307, %v479, %v658
      %v876 = vsel %vm307, %v480, %v660
      %vm877 = vcmask 130048
      %v878 = vsel %vm877, %v841, %v734
      %v879 = vsel %vm877, %v842, %v736
      %v880 = vsel %vm877, %v843, %v738
      %v881 = vsel %vm877, %v844, %v740
      %v882 = vsel %vm877, %v845, %v742
      %v883 = vsel %vm877, %v846, %v744
      %v884 = vsel %vm877, %v847, %v746
      %v885 = vsel %vm877, %v848, %v748
      %v886 = vsel %vm877, %v849, %v750
      %v887 = vsel %vm877, %v850, %v752
      %v888 = vsel %vm877, %v851, %v754
      %v889 = vsel %vm877, %v852, %v756
      %v890 = vsel %vm877, %v853, %v758
      %v891 = vsel %vm877, %v854, %v760
      %v892 = vsel %vm877, %v855, %v762
      %v893 = vsel %vm877, %v856, %v764
      %v894 = vsel %vm877, %v857, %v766
      %v895 = vsel %vm877, %v858, %v768
      %v896 = vsel %vm877, %v859, %v770
      %v897 = vsel %vm877, %v860, %v772
      %v898 = vsel %vm877, %v861, %v774
      %v899 = vsel %vm877, %v862, %v776
      %v900 = vsel %vm877, %v863, %v778
      %v901 = vsel %vm877, %v864, %v780
      %v902 = vsel %vm877, %v865, %v782
      %v903 = vsel %vm877, %v866, %v784
      %v904 = vsel %vm877, %v867, %v786
      %v905 = vsel %vm877, %v868, %v788
      %v906 = vsel %vm877, %v869, %v790
      %v907 = vsel %vm877, %v870, %v792
      %v908 = vsel %vm877, %v871, %v794
      %v909 = vsel %vm877, %v872, %v796
      %v910 = vsel %vm877, %v873, %v798
      %v911 = vsel %vm877, %v874, %v800
      %v912 = vsel %vm877, %v875, %v802
      %v913 = vsel %vm877, %v876, %v804
      %v914 = vpack.c.bf16 %v879, %v878
      %v915 = vpack.c.bf16 %v881, %v880
      %v916 = vpack.c.bf16 %v883, %v882
      %v917 = vpack.c.bf16 %v885, %v884
      %v918 = vpack.c.bf16 %v887, %v886
      %v919 = vpack.c.bf16 %v889, %v888
      %v920 = vpack.c.bf16 %v891, %v890
      %v921 = vpack.c.bf16 %v893, %v892
      %v922 = vpack.c.bf16 %v895, %v894
      %v923 = vpack.c.bf16 %v897, %v896
      %v924 = vpack.c.bf16 %v899, %v898
      %v925 = vpack.c.bf16 %v901, %v900
      %v926 = vpack.c.bf16 %v903, %v902
      %v927 = vpack.c.bf16 %v905, %v904
      %v928 = vpack.c.bf16 %v907, %v906
      %v929 = vpack.c.bf16 %v909, %v908
      %v930 = vpack.c.bf16 %v911, %v910
      %v931 = vpack.c.bf16 %v913, %v912
      %v932 = vld [vmem:[%s1] sm:$0xf]
      %v933 = vld [vmem:[%s1 + $0x4] sm:$0xf]
      %v934 = vld [vmem:[%s1 + $0x8] sm:$0xf]
      %s935 = scalar_lea.vmem %s1, 12
      %v936 = vld [vmem:[%s935] sm:$0xf]
      %v937 = vld [vmem:[%s935 + $0x4] sm:$0xf]
      %v938 = vld [vmem:[%s935 + $0x8] sm:$0xf]
      %v942 = vunpack.c.l.b16 %v936
      %v943 = vunpack.c.l.b16 %v937
      %v944 = vunpack.c.l.b16 %v938
      %v945 = vpack.c.b16 %v943, %v942
      %v946 = vpack.c.b16 %v944, %v944
      %vm948 = vcmask 195584
      %v950 = vsel %vm948, %v915, 0
      %v953 = vsel %vm948, %v916, 0
      %v956 = vsel %vm948, %v917, 0
      %v959 = vsel %vm948, %v918, 0
      %v962 = vsel %vm948, %v919, 0
      %v965 = vsel %vm948, %v920, 0
      %v968 = vsel %vm948, %v921, 0
      %v971 = vsel %vm948, %v922, 0
      %v974 = vsel %vm948, %v923, 0
      %v977 = vsel %vm948, %v924, 0
      %v980 = vsel %vm948, %v925, 0
      %v983 = vsel %vm948, %v926, 0
      %v986 = vsel %vm948, %v927, 0
      %v989 = vsel %vm948, %v928, 0
      %v992 = vsel %vm948, %v929, 0
      %v995 = vsel %vm948, %v930, 0
      %vm997 = vcmask 1043456
      %v999 = vsel %vm997, %v946, 0
      %1001 = vmatprep.subr.bf16.mxu0 0
      %1002 = vmatpush1.bf16.msra.mxu0 0
      %1003 = vmatprep.subr.bf16.mxu0 0
      %1004 = vmatpush1.bf16.msra.mxu0 0
      %1005 = vmatprep.subr.bf16.mxu0 0
      %1006 = vmatpush1.bf16.msra.mxu0 0
      %1007 = vmatprep.subr.bf16.mxu0 0
      %1008 = vmatpush1.bf16.msra.mxu0 0
      %1009 = vmatprep.subr.bf16.mxu0 0
      %1010 = vmatpush1.bf16.msra.mxu0 0
      %1011 = vmatprep.subr.bf16.mxu0 0
      %1012 = vmatpush1.bf16.msra.mxu0 0
      %1013 = vmatprep.subr.bf16.mxu0 0
      %1014 = vmatpush1.bf16.msra.mxu0 %v999
      %1015 = vmatprep.subr.bf16.mxu0 0
      %1016 = vmatpush1.bf16.msra.mxu0 %v945
      %1017 = vmatprep.subr.bf16.mxu0 0
      %1018 = vmatpush2.bf16.msra.mxu0 0
      %1019 = vmatprep.subr.bf16.mxu0 0
      %1020 = vmatpush2.bf16.msra.mxu0 0
      %1021 = vmatprep.subr.bf16.mxu0 0
      %1022 = vmatpush2.bf16.msra.mxu0 0
      %1023 = vmatprep.subr.bf16.mxu0 0
      %1024 = vmatpush2.bf16.msra.mxu0 0
      %1025 = vmatprep.subr.bf16.mxu0 0
      %1026 = vmatpush2.bf16.msra.mxu0 0
      %1027 = vmatprep.subr.bf16.mxu0 0
      %1028 = vmatpush2.bf16.msra.mxu0 0
      %1029 = vmatprep.subr.bf16.mxu0 0
      %1030 = vmatpush2.bf16.msra.mxu0 0
      %1031 = vmatprep.subr.bf16.mxu0 0
      %1032 = vmatpush2.bf16.msra.mxu0 0
      %1033 = vmatprep.mubr.bf16.mxu0 0
      %1034 = vmatmul.mubr.bf16.gmra.mxu0 %v950
      %v1035 = vpop.f32.mrf.mxu0
      %v1036 = vadd.f32 0.0, %v1035
      %v1037 = vpop.f32.mrf.mxu0
      %v1038 = vpop.f32.mrf.mxu0
      %v1039 = vadd.f32 0.0, %v1038
      %v1040 = vpop.f32.mrf.mxu0
      %1041 = vmatprep.mubr.bf16.mxu0 0
      %1042 = vmatmul.mubr.bf16.gmra.mxu0 %v953
      %v1043 = vpop.f32.mrf.mxu0
      %v1044 = vadd.f32 0.0, %v1043
      %v1045 = vpop.f32.mrf.mxu0
      %v1046 = vpop.f32.mrf.mxu0
      %v1047 = vadd.f32 0.0, %v1046
      %v1048 = vpop.f32.mrf.mxu0
      %1049 = vmatprep.mubr.bf16.mxu0 0
      %1050 = vmatmul.mubr.bf16.gmra.mxu0 %v956
      %v1051 = vpop.f32.mrf.mxu0
      %v1052 = vadd.f32 0.0, %v1051
      %v1053 = vpop.f32.mrf.mxu0
      %v1054 = vpop.f32.mrf.mxu0
      %v1055 = vadd.f32 0.0, %v1054
      %v1056 = vpop.f32.mrf.mxu0
      %1057 = vmatprep.mubr.bf16.mxu0 0
      %1058 = vmatmul.mubr.bf16.gmra.mxu0 %v959
      %v1059 = vpop.f32.mrf.mxu0
      %v1060 = vadd.f32 0.0, %v1059
      %v1061 = vpop.f32.mrf.mxu0
      %v1062 = vpop.f32.mrf.mxu0
      %v1063 = vadd.f32 0.0, %v1062
      %v1064 = vpop.f32.mrf.mxu0
      %1065 = vmatprep.mubr.bf16.mxu0 0
      %1066 = vmatmul.mubr.bf16.gmra.mxu0 %v962
      %v1067 = vpop.f32.mrf.mxu0
      %v1068 = vadd.f32 0.0, %v1067
      %v1069 = vpop.f32.mrf.mxu0
      %v1070 = vpop.f32.mrf.mxu0
      %v1071 = vadd.f32 0.0, %v1070
      %v1072 = vpop.f32.mrf.mxu0
      %1073 = vmatprep.mubr.bf16.mxu0 0
      %1074 = vmatmul.mubr.bf16.gmra.mxu0 %v965
      %v1075 = vpop.f32.mrf.mxu0
      %v1076 = vadd.f32 0.0, %v1075
      %v1077 = vpop.f32.mrf.mxu0
      %v1078 = vpop.f32.mrf.mxu0
      %v1079 = vadd.f32 0.0, %v1078
      %v1080 = vpop.f32.mrf.mxu0
      %1081 = vmatprep.mubr.bf16.mxu0 0
      %1082 = vmatmul.mubr.bf16.gmra.mxu0 %v968
      %v1083 = vpop.f32.mrf.mxu0
      %v1084 = vadd.f32 0.0, %v1083
      %v1085 = vpop.f32.mrf.mxu0
      %v1086 = vpop.f32.mrf.mxu0
      %v1087 = vadd.f32 0.0, %v1086
      %v1088 = vpop.f32.mrf.mxu0
      %1089 = vmatprep.mubr.bf16.mxu0 0
      %1090 = vmatmul.mubr.bf16.gmra.mxu0 %v971
      %v1091 = vpop.f32.mrf.mxu0
      %v1092 = vadd.f32 0.0, %v1091
      %v1093 = vpop.f32.mrf.mxu0
      %v1094 = vpop.f32.mrf.mxu0
      %v1095 = vadd.f32 0.0, %v1094
      %v1096 = vpop.f32.mrf.mxu0
      %1097 = vmatprep.mubr.bf16.mxu0 0
      %1098 = vmatmul.mubr.bf16.gmra.mxu0 %v974
      %v1099 = vpop.f32.mrf.mxu0
      %v1100 = vadd.f32 0.0, %v1099
      %v1101 = vpop.f32.mrf.mxu0
      %v1102 = vpop.f32.mrf.mxu0
      %v1103 = vadd.f32 0.0, %v1102
      %v1104 = vpop.f32.mrf.mxu0
      %1105 = vmatprep.mubr.bf16.mxu0 0
      %1106 = vmatmul.mubr.bf16.gmra.mxu0 %v977
      %v1107 = vpop.f32.mrf.mxu0
      %v1108 = vadd.f32 0.0, %v1107
      %v1109 = vpop.f32.mrf.mxu0
      %v1110 = vpop.f32.mrf.mxu0
      %v1111 = vadd.f32 0.0, %v1110
      %v1112 = vpop.f32.mrf.mxu0
      %1113 = vmatprep.mubr.bf16.mxu0 0
      %1114 = vmatmul.mubr.bf16.gmra.mxu0 %v980
      %v1115 = vpop.f32.mrf.mxu0
      %v1116 = vadd.f32 0.0, %v1115
      %v1117 = vpop.f32.mrf.mxu0
      %v1118 = vpop.f32.mrf.mxu0
      %v1119 = vadd.f32 0.0, %v1118
      %v1120 = vpop.f32.mrf.mxu0
      %1121 = vmatprep.mubr.bf16.mxu0 0
      %1122 = vmatmul.mubr.bf16.gmra.mxu0 %v983
      %v1123 = vpop.f32.mrf.mxu0
      %v1124 = vadd.f32 0.0, %v1123
      %v1125 = vpop.f32.mrf.mxu0
      %v1126 = vpop.f32.mrf.mxu0
      %v1127 = vadd.f32 0.0, %v1126
      %v1128 = vpop.f32.mrf.mxu0
      %1129 = vmatprep.mubr.bf16.mxu0 0
      %1130 = vmatmul.mubr.bf16.gmra.mxu0 %v986
      %v1131 = vpop.f32.mrf.mxu0
      %v1132 = vadd.f32 0.0, %v1131
      %v1133 = vpop.f32.mrf.mxu0
      %v1134 = vpop.f32.mrf.mxu0
      %v1135 = vadd.f32 0.0, %v1134
      %v1136 = vpop.f32.mrf.mxu0
      %1137 = vmatprep.mubr.bf16.mxu0 0
      %1138 = vmatmul.mubr.bf16.gmra.mxu0 %v989
      %v1139 = vpop.f32.mrf.mxu0
      %v1140 = vadd.f32 0.0, %v1139
      %v1141 = vpop.f32.mrf.mxu0
      %v1142 = vpop.f32.mrf.mxu0
      %v1143 = vadd.f32 0.0, %v1142
      %v1144 = vpop.f32.mrf.mxu0
      %1145 = vmatprep.mubr.bf16.mxu0 0
      %1146 = vmatmul.mubr.bf16.gmra.mxu0 %v992
      %v1147 = vpop.f32.mrf.mxu0
      %v1148 = vadd.f32 0.0, %v1147
      %v1149 = vpop.f32.mrf.mxu0
      %v1150 = vpop.f32.mrf.mxu0
      %v1151 = vadd.f32 0.0, %v1150
      %v1152 = vpop.f32.mrf.mxu0
      %1153 = vmatprep.mubr.bf16.mxu0 0
      %1154 = vmatmul.mubr.bf16.gmra.mxu0 %v995
      %v1155 = vpop.f32.mrf.mxu0
      %v1156 = vadd.f32 0.0, %v1155
      %v1157 = vpop.f32.mrf.mxu0
      %v1158 = vpop.f32.mrf.mxu0
      %v1159 = vadd.f32 0.0, %v1158
      %v1160 = vpop.f32.mrf.mxu0
      %1161 = vdwg.mxu0
      %v1165 = vunpack.c.l.b16 %v932
      %v1166 = vunpack.c.l.b16 %v933
      %v1167 = vunpack.c.l.b16 %v934
      %v1168 = vpack.c.b16 %v1166, %v1165
      %v1169 = vpack.c.b16 %v1167, %v1167
      %v1172 = vsel %vm948, %v914, 0
      %v1175 = vsel %vm997, %v1169, 0
      %1177 = vmatprep.subr.bf16.mxu0 0
      %1178 = vmatpush1.bf16.msra.mxu0 0
      %1179 = vmatprep.subr.bf16.mxu0 0
      %1180 = vmatpush1.bf16.msra.mxu0 0
      %1181 = vmatprep.subr.bf16.mxu0 0
      %1182 = vmatpush1.bf16.msra.mxu0 0
      %1183 = vmatprep.subr.bf16.mxu0 0
      %1184 = vmatpush1.bf16.msra.mxu0 0
      %1185 = vmatprep.subr.bf16.mxu0 0
      %1186 = vmatpush1.bf16.msra.mxu0 0
      %1187 = vmatprep.subr.bf16.mxu0 0
      %1188 = vmatpush1.bf16.msra.mxu0 0
      %1189 = vmatprep.subr.bf16.mxu0 0
      %1190 = vmatpush1.bf16.msra.mxu0 %v1175
      %1191 = vmatprep.subr.bf16.mxu0 0
      %1192 = vmatpush1.bf16.msra.mxu0 %v1168
      %1193 = vmatprep.subr.bf16.mxu0 0
      %1194 = vmatpush2.bf16.msra.mxu0 0
      %1195 = vmatprep.subr.bf16.mxu0 0
      %1196 = vmatpush2.bf16.msra.mxu0 0
      %1197 = vmatprep.subr.bf16.mxu0 0
      %1198 = vmatpush2.bf16.msra.mxu0 0
      %1199 = vmatprep.subr.bf16.mxu0 0
      %1200 = vmatpush2.bf16.msra.mxu0 0
      %1201 = vmatprep.subr.bf16.mxu0 0
      %1202 = vmatpush2.bf16.msra.mxu0 0
      %1203 = vmatprep.subr.bf16.mxu0 0
      %1204 = vmatpush2.bf16.msra.mxu0 0
      %1205 = vmatprep.subr.bf16.mxu0 0
      %1206 = vmatpush2.bf16.msra.mxu0 0
      %1207 = vmatprep.subr.bf16.mxu0 0
      %1208 = vmatpush2.bf16.msra.mxu0 0
      %1209 = vmatprep.mubr.bf16.mxu0 0
      %1210 = vmatmul.mubr.bf16.gmra.mxu0 %v1172
      %v1211 = vpop.f32.mrf.mxu0
      %v1212 = vadd.f32 %v1036, %v1211
      %v1213 = vpop.f32.mrf.mxu0
      %v1214 = vpop.f32.mrf.mxu0
      %v1215 = vadd.f32 %v1039, %v1214
      %v1216 = vpop.f32.mrf.mxu0
      %1217 = vmatprep.mubr.bf16.mxu0 0
      %1218 = vmatmul.mubr.bf16.gmra.mxu0 %v950
      %v1219 = vpop.f32.mrf.mxu0
      %v1220 = vadd.f32 %v1044, %v1219
      %v1221 = vpop.f32.mrf.mxu0
      %v1222 = vpop.f32.mrf.mxu0
      %v1223 = vadd.f32 %v1047, %v1222
      %v1224 = vpop.f32.mrf.mxu0
      %1225 = vmatprep.mubr.bf16.mxu0 0
      %1226 = vmatmul.mubr.bf16.gmra.mxu0 %v953
      %v1227 = vpop.f32.mrf.mxu0
      %v1228 = vadd.f32 %v1052, %v1227
      %v1229 = vpop.f32.mrf.mxu0
      %v1230 = vpop.f32.mrf.mxu0
      %v1231 = vadd.f32 %v1055, %v1230
      %v1232 = vpop.f32.mrf.mxu0
      %1233 = vmatprep.mubr.bf16.mxu0 0
      %1234 = vmatmul.mubr.bf16.gmra.mxu0 %v956
      %v1235 = vpop.f32.mrf.mxu0
      %v1236 = vadd.f32 %v1060, %v1235
      %v1237 = vpop.f32.mrf.mxu0
      %v1238 = vpop.f32.mrf.mxu0
      %v1239 = vadd.f32 %v1063, %v1238
      %v1240 = vpop.f32.mrf.mxu0
      %1241 = vmatprep.mubr.bf16.mxu0 0
      %1242 = vmatmul.mubr.bf16.gmra.mxu0 %v959
      %v1243 = vpop.f32.mrf.mxu0
      %v1244 = vadd.f32 %v1068, %v1243
      %v1245 = vpop.f32.mrf.mxu0
      %v1246 = vpop.f32.mrf.mxu0
      %v1247 = vadd.f32 %v1071, %v1246
      %v1248 = vpop.f32.mrf.mxu0
      %1249 = vmatprep.mubr.bf16.mxu0 0
      %1250 = vmatmul.mubr.bf16.gmra.mxu0 %v962
      %v1251 = vpop.f32.mrf.mxu0
      %v1252 = vadd.f32 %v1076, %v1251
      %v1253 = vpop.f32.mrf.mxu0
      %v1254 = vpop.f32.mrf.mxu0
      %v1255 = vadd.f32 %v1079, %v1254
      %v1256 = vpop.f32.mrf.mxu0
      %1257 = vmatprep.mubr.bf16.mxu0 0
      %1258 = vmatmul.mubr.bf16.gmra.mxu0 %v965
      %v1259 = vpop.f32.mrf.mxu0
      %v1260 = vadd.f32 %v1084, %v1259
      %v1261 = vpop.f32.mrf.mxu0
      %v1262 = vpop.f32.mrf.mxu0
      %v1263 = vadd.f32 %v1087, %v1262
      %v1264 = vpop.f32.mrf.mxu0
      %1265 = vmatprep.mubr.bf16.mxu0 0
      %1266 = vmatmul.mubr.bf16.gmra.mxu0 %v968
      %v1267 = vpop.f32.mrf.mxu0
      %v1268 = vadd.f32 %v1092, %v1267
      %v1269 = vpop.f32.mrf.mxu0
      %v1270 = vpop.f32.mrf.mxu0
      %v1271 = vadd.f32 %v1095, %v1270
      %v1272 = vpop.f32.mrf.mxu0
      %1273 = vmatprep.mubr.bf16.mxu0 0
      %1274 = vmatmul.mubr.bf16.gmra.mxu0 %v971
      %v1275 = vpop.f32.mrf.mxu0
      %v1276 = vadd.f32 %v1100, %v1275
      %v1277 = vpop.f32.mrf.mxu0
      %v1278 = vpop.f32.mrf.mxu0
      %v1279 = vadd.f32 %v1103, %v1278
      %v1280 = vpop.f32.mrf.mxu0
      %1281 = vmatprep.mubr.bf16.mxu0 0
      %1282 = vmatmul.mubr.bf16.gmra.mxu0 %v974
      %v1283 = vpop.f32.mrf.mxu0
      %v1284 = vadd.f32 %v1108, %v1283
      %v1285 = vpop.f32.mrf.mxu0
      %v1286 = vpop.f32.mrf.mxu0
      %v1287 = vadd.f32 %v1111, %v1286
      %v1288 = vpop.f32.mrf.mxu0
      %1289 = vmatprep.mubr.bf16.mxu0 0
      %1290 = vmatmul.mubr.bf16.gmra.mxu0 %v977
      %v1291 = vpop.f32.mrf.mxu0
      %v1292 = vadd.f32 %v1116, %v1291
      %v1293 = vpop.f32.mrf.mxu0
      %v1294 = vpop.f32.mrf.mxu0
      %v1295 = vadd.f32 %v1119, %v1294
      %v1296 = vpop.f32.mrf.mxu0
      %1297 = vmatprep.mubr.bf16.mxu0 0
      %1298 = vmatmul.mubr.bf16.gmra.mxu0 %v980
      %v1299 = vpop.f32.mrf.mxu0
      %v1300 = vadd.f32 %v1124, %v1299
      %v1301 = vpop.f32.mrf.mxu0
      %v1302 = vpop.f32.mrf.mxu0
      %v1303 = vadd.f32 %v1127, %v1302
      %v1304 = vpop.f32.mrf.mxu0
      %1305 = vmatprep.mubr.bf16.mxu0 0
      %1306 = vmatmul.mubr.bf16.gmra.mxu0 %v983
      %v1307 = vpop.f32.mrf.mxu0
      %v1308 = vadd.f32 %v1132, %v1307
      %v1309 = vpop.f32.mrf.mxu0
      %v1310 = vpop.f32.mrf.mxu0
      %v1311 = vadd.f32 %v1135, %v1310
      %v1312 = vpop.f32.mrf.mxu0
      %1313 = vmatprep.mubr.bf16.mxu0 0
      %1314 = vmatmul.mubr.bf16.gmra.mxu0 %v986
      %v1315 = vpop.f32.mrf.mxu0
      %v1316 = vadd.f32 %v1140, %v1315
      %v1317 = vpop.f32.mrf.mxu0
      %v1318 = vpop.f32.mrf.mxu0
      %v1319 = vadd.f32 %v1143, %v1318
      %v1320 = vpop.f32.mrf.mxu0
      %1321 = vmatprep.mubr.bf16.mxu0 0
      %1322 = vmatmul.mubr.bf16.gmra.mxu0 %v989
      %v1323 = vpop.f32.mrf.mxu0
      %v1324 = vadd.f32 %v1148, %v1323
      %v1325 = vpop.f32.mrf.mxu0
      %v1326 = vpop.f32.mrf.mxu0
      %v1327 = vadd.f32 %v1151, %v1326
      %v1328 = vpop.f32.mrf.mxu0
      %1329 = vmatprep.mubr.bf16.mxu0 0
      %1330 = vmatmul.mubr.bf16.gmra.mxu0 %v992
      %v1331 = vpop.f32.mrf.mxu0
      %v1332 = vadd.f32 %v1156, %v1331
      %v1333 = vpop.f32.mrf.mxu0
      %v1334 = vpop.f32.mrf.mxu0
      %v1335 = vadd.f32 %v1159, %v1334
      %v1336 = vpop.f32.mrf.mxu0
      %1337 = vdwg.mxu0
      %s1338 = scalar_lea.vmem %s1, 24
      %v1339 = vld [vmem:[%s1338] sm:$0xf]
      %v1340 = vld [vmem:[%s1338 + $0x4] sm:$0xf]
      %v1341 = vld [vmem:[%s1338 + $0x8] sm:$0xf]
      %v1345 = vunpack.c.l.b16 %v1339
      %v1346 = vunpack.c.l.b16 %v1340
      %v1347 = vunpack.c.l.b16 %v1341
      %v1348 = vpack.c.b16 %v1346, %v1345
      %v1349 = vpack.c.b16 %v1347, %v1347
      %v1352 = vsel %vm948, %v931, 0
      %v1355 = vsel %vm997, %v1349, 0
      %1357 = vmatprep.subr.bf16.mxu0 0
      %1358 = vmatpush1.bf16.msra.mxu0 0
      %1359 = vmatprep.subr.bf16.mxu0 0
      %1360 = vmatpush1.bf16.msra.mxu0 0
      %1361 = vmatprep.subr.bf16.mxu0 0
      %1362 = vmatpush1.bf16.msra.mxu0 0
      %1363 = vmatprep.subr.bf16.mxu0 0
      %1364 = vmatpush1.bf16.msra.mxu0 0
      %1365 = vmatprep.subr.bf16.mxu0 0
      %1366 = vmatpush1.bf16.msra.mxu0 0
      %1367 = vmatprep.subr.bf16.mxu0 0
      %1368 = vmatpush1.bf16.msra.mxu0 0
      %1369 = vmatprep.subr.bf16.mxu0 0
      %1370 = vmatpush1.bf16.msra.mxu0 %v1355
      %1371 = vmatprep.subr.bf16.mxu0 0
      %1372 = vmatpush1.bf16.msra.mxu0 %v1348
      %1373 = vmatprep.subr.bf16.mxu0 0
      %1374 = vmatpush2.bf16.msra.mxu0 0
      %1375 = vmatprep.subr.bf16.mxu0 0
      %1376 = vmatpush2.bf16.msra.mxu0 0
      %1377 = vmatprep.subr.bf16.mxu0 0
      %1378 = vmatpush2.bf16.msra.mxu0 0
      %1379 = vmatprep.subr.bf16.mxu0 0
      %1380 = vmatpush2.bf16.msra.mxu0 0
      %1381 = vmatprep.subr.bf16.mxu0 0
      %1382 = vmatpush2.bf16.msra.mxu0 0
      %1383 = vmatprep.subr.bf16.mxu0 0
      %1384 = vmatpush2.bf16.msra.mxu0 0
      %1385 = vmatprep.subr.bf16.mxu0 0
      %1386 = vmatpush2.bf16.msra.mxu0 0
      %1387 = vmatprep.subr.bf16.mxu0 0
      %1388 = vmatpush2.bf16.msra.mxu0 0
      %1389 = vmatprep.mubr.bf16.mxu0 0
      %1390 = vmatmul.mubr.bf16.gmra.mxu0 %v953
      %v1391 = vpop.f32.mrf.mxu0
      %v1392 = vadd.f32 0.0, %v1391
      %v1393 = vpop.f32.mrf.mxu0
      %v1394 = vpop.f32.mrf.mxu0
      %v1395 = vadd.f32 0.0, %v1394
      %v1396 = vpop.f32.mrf.mxu0
      %1397 = vmatprep.mubr.bf16.mxu0 0
      %1398 = vmatmul.mubr.bf16.gmra.mxu0 %v956
      %v1399 = vpop.f32.mrf.mxu0
      %v1400 = vadd.f32 0.0, %v1399
      %v1401 = vpop.f32.mrf.mxu0
      %v1402 = vpop.f32.mrf.mxu0
      %v1403 = vadd.f32 0.0, %v1402
      %v1404 = vpop.f32.mrf.mxu0
      %1405 = vmatprep.mubr.bf16.mxu0 0
      %1406 = vmatmul.mubr.bf16.gmra.mxu0 %v959
      %v1407 = vpop.f32.mrf.mxu0
      %v1408 = vadd.f32 0.0, %v1407
      %v1409 = vpop.f32.mrf.mxu0
      %v1410 = vpop.f32.mrf.mxu0
      %v1411 = vadd.f32 0.0, %v1410
      %v1412 = vpop.f32.mrf.mxu0
      %1413 = vmatprep.mubr.bf16.mxu0 0
      %1414 = vmatmul.mubr.bf16.gmra.mxu0 %v962
      %v1415 = vpop.f32.mrf.mxu0
      %v1416 = vadd.f32 0.0, %v1415
      %v1417 = vpop.f32.mrf.mxu0
      %v1418 = vpop.f32.mrf.mxu0
      %v1419 = vadd.f32 0.0, %v1418
      %v1420 = vpop.f32.mrf.mxu0
      %1421 = vmatprep.mubr.bf16.mxu0 0
      %1422 = vmatmul.mubr.bf16.gmra.mxu0 %v965
      %v1423 = vpop.f32.mrf.mxu0
      %v1424 = vadd.f32 0.0, %v1423
      %v1425 = vpop.f32.mrf.mxu0
      %v1426 = vpop.f32.mrf.mxu0
      %v1427 = vadd.f32 0.0, %v1426
      %v1428 = vpop.f32.mrf.mxu0
      %1429 = vmatprep.mubr.bf16.mxu0 0
      %1430 = vmatmul.mubr.bf16.gmra.mxu0 %v968
      %v1431 = vpop.f32.mrf.mxu0
      %v1432 = vadd.f32 0.0, %v1431
      %v1433 = vpop.f32.mrf.mxu0
      %v1434 = vpop.f32.mrf.mxu0
      %v1435 = vadd.f32 0.0, %v1434
      %v1436 = vpop.f32.mrf.mxu0
      %1437 = vmatprep.mubr.bf16.mxu0 0
      %1438 = vmatmul.mubr.bf16.gmra.mxu0 %v971
      %v1439 = vpop.f32.mrf.mxu0
      %v1440 = vadd.f32 0.0, %v1439
      %v1441 = vpop.f32.mrf.mxu0
      %v1442 = vpop.f32.mrf.mxu0
      %v1443 = vadd.f32 0.0, %v1442
      %v1444 = vpop.f32.mrf.mxu0
      %1445 = vmatprep.mubr.bf16.mxu0 0
      %1446 = vmatmul.mubr.bf16.gmra.mxu0 %v974
      %v1447 = vpop.f32.mrf.mxu0
      %v1448 = vadd.f32 0.0, %v1447
      %v1449 = vpop.f32.mrf.mxu0
      %v1450 = vpop.f32.mrf.mxu0
      %v1451 = vadd.f32 0.0, %v1450
      %v1452 = vpop.f32.mrf.mxu0
      %1453 = vmatprep.mubr.bf16.mxu0 0
      %1454 = vmatmul.mubr.bf16.gmra.mxu0 %v977
      %v1455 = vpop.f32.mrf.mxu0
      %v1456 = vadd.f32 0.0, %v1455
      %v1457 = vpop.f32.mrf.mxu0
      %v1458 = vpop.f32.mrf.mxu0
      %v1459 = vadd.f32 0.0, %v1458
      %v1460 = vpop.f32.mrf.mxu0
      %1461 = vmatprep.mubr.bf16.mxu0 0
      %1462 = vmatmul.mubr.bf16.gmra.mxu0 %v980
      %v1463 = vpop.f32.mrf.mxu0
      %v1464 = vadd.f32 0.0, %v1463
      %v1465 = vpop.f32.mrf.mxu0
      %v1466 = vpop.f32.mrf.mxu0
      %v1467 = vadd.f32 0.0, %v1466
      %v1468 = vpop.f32.mrf.mxu0
      %1469 = vmatprep.mubr.bf16.mxu0 0
      %1470 = vmatmul.mubr.bf16.gmra.mxu0 %v983
      %v1471 = vpop.f32.mrf.mxu0
      %v1472 = vadd.f32 0.0, %v1471
      %v1473 = vpop.f32.mrf.mxu0
      %v1474 = vpop.f32.mrf.mxu0
      %v1475 = vadd.f32 0.0, %v1474
      %v1476 = vpop.f32.mrf.mxu0
      %1477 = vmatprep.mubr.bf16.mxu0 0
      %1478 = vmatmul.mubr.bf16.gmra.mxu0 %v986
      %v1479 = vpop.f32.mrf.mxu0
      %v1480 = vadd.f32 0.0, %v1479
      %v1481 = vpop.f32.mrf.mxu0
      %v1482 = vpop.f32.mrf.mxu0
      %v1483 = vadd.f32 0.0, %v1482
      %v1484 = vpop.f32.mrf.mxu0
      %1485 = vmatprep.mubr.bf16.mxu0 0
      %1486 = vmatmul.mubr.bf16.gmra.mxu0 %v989
      %v1487 = vpop.f32.mrf.mxu0
      %v1488 = vadd.f32 0.0, %v1487
      %v1489 = vpop.f32.mrf.mxu0
      %v1490 = vpop.f32.mrf.mxu0
      %v1491 = vadd.f32 0.0, %v1490
      %v1492 = vpop.f32.mrf.mxu0
      %1493 = vmatprep.mubr.bf16.mxu0 0
      %1494 = vmatmul.mubr.bf16.gmra.mxu0 %v992
      %v1495 = vpop.f32.mrf.mxu0
      %v1496 = vadd.f32 0.0, %v1495
      %v1497 = vpop.f32.mrf.mxu0
      %v1498 = vpop.f32.mrf.mxu0
      %v1499 = vadd.f32 0.0, %v1498
      %v1500 = vpop.f32.mrf.mxu0
      %1501 = vmatprep.mubr.bf16.mxu0 0
      %1502 = vmatmul.mubr.bf16.gmra.mxu0 %v995
      %v1503 = vpop.f32.mrf.mxu0
      %v1504 = vadd.f32 0.0, %v1503
      %v1505 = vpop.f32.mrf.mxu0
      %v1506 = vpop.f32.mrf.mxu0
      %v1507 = vadd.f32 0.0, %v1506
      %v1508 = vpop.f32.mrf.mxu0
      %1509 = vmatprep.mubr.bf16.mxu0 0
      %1510 = vmatmul.mubr.bf16.gmra.mxu0 %v1352
      %v1511 = vpop.f32.mrf.mxu0
      %v1512 = vadd.f32 0.0, %v1511
      %v1513 = vpop.f32.mrf.mxu0
      %v1514 = vpop.f32.mrf.mxu0
      %v1515 = vadd.f32 0.0, %v1514
      %v1516 = vpop.f32.mrf.mxu0
      %1517 = vdwg.mxu0
      %v1518 = vadd.f32 %v1212, %v1392
      %v1519 = vadd.f32 %v1215, %v1395
      %v1520 = vadd.f32 %v1220, %v1400
      %v1521 = vadd.f32 %v1223, %v1403
      %v1522 = vadd.f32 %v1228, %v1408
      %v1523 = vadd.f32 %v1231, %v1411
      %v1524 = vadd.f32 %v1236, %v1416
      %v1525 = vadd.f32 %v1239, %v1419
      %v1526 = vadd.f32 %v1244, %v1424
      %v1527 = vadd.f32 %v1247, %v1427
      %v1528 = vadd.f32 %v1252, %v1432
      %v1529 = vadd.f32 %v1255, %v1435
      %v1530 = vadd.f32 %v1260, %v1440
      %v1531 = vadd.f32 %v1263, %v1443
      %v1532 = vadd.f32 %v1268, %v1448
      %v1533 = vadd.f32 %v1271, %v1451
      %v1534 = vadd.f32 %v1276, %v1456
      %v1535 = vadd.f32 %v1279, %v1459
      %v1536 = vadd.f32 %v1284, %v1464
      %v1537 = vadd.f32 %v1287, %v1467
      %v1538 = vadd.f32 %v1292, %v1472
      %v1539 = vadd.f32 %v1295, %v1475
      %v1540 = vadd.f32 %v1300, %v1480
      %v1541 = vadd.f32 %v1303, %v1483
      %v1542 = vadd.f32 %v1308, %v1488
      %v1543 = vadd.f32 %v1311, %v1491
      %v1544 = vadd.f32 %v1316, %v1496
      %v1545 = vadd.f32 %v1319, %v1499
      %v1546 = vadd.f32 %v1324, %v1504
      %v1547 = vadd.f32 %v1327, %v1507
      %v1548 = vadd.f32 %v1332, %v1512
      %v1549 = vadd.f32 %v1335, %v1515
      %v1550 = vsel %vm307, %v1518, 0.0
      %v1551 = vsel %vm307, %v1519, 0.0
      %v1552 = vadd.f32 %v1550, %v1551
      %v1553 = vrot.slane %v1552, 4
      %v1554 = vadd.f32 %v1552, %v1553
      %v1555 = vrot.slane %v1554, 2
      %v1556 = vadd.f32 %v1554, %v1555
      %v1557 = vrot.slane %v1556, 1
      %v1558 = vadd.f32 %v1556, %v1557
      %v1559 = vsel %vm307, %v1520, 0.0
      %v1560 = vsel %vm307, %v1521, 0.0
      %v1561 = vadd.f32 %v1559, %v1560
      %v1562 = vrot.slane %v1561, 4
      %v1563 = vadd.f32 %v1561, %v1562
      %v1564 = vrot.slane %v1563, 2
      %v1565 = vadd.f32 %v1563, %v1564
      %v1566 = vrot.slane %v1565, 1
      %v1567 = vadd.f32 %v1565, %v1566
      %v1568 = vsel %vm307, %v1522, 0.0
      %v1569 = vsel %vm307, %v1523, 0.0
      %v1570 = vadd.f32 %v1568, %v1569
      %v1571 = vrot.slane %v1570, 4
      %v1572 = vadd.f32 %v1570, %v1571
      %v1573 = vrot.slane %v1572, 2
      %v1574 = vadd.f32 %v1572, %v1573
      %v1575 = vrot.slane %v1574, 1
      %v1576 = vadd.f32 %v1574, %v1575
      %v1577 = vsel %vm307, %v1524, 0.0
      %v1578 = vsel %vm307, %v1525, 0.0
      %v1579 = vadd.f32 %v1577, %v1578
      %v1580 = vrot.slane %v1579, 4
      %v1581 = vadd.f32 %v1579, %v1580
      %v1582 = vrot.slane %v1581, 2
      %v1583 = vadd.f32 %v1581, %v1582
      %v1584 = vrot.slane %v1583, 1
      %v1585 = vadd.f32 %v1583, %v1584
      %v1586 = vsel %vm307, %v1526, 0.0
      %v1587 = vsel %vm307, %v1527, 0.0
      %v1588 = vadd.f32 %v1586, %v1587
      %v1589 = vrot.slane %v1588, 4
      %v1590 = vadd.f32 %v1588, %v1589
      %v1591 = vrot.slane %v1590, 2
      %v1592 = vadd.f32 %v1590, %v1591
      %v1593 = vrot.slane %v1592, 1
      %v1594 = vadd.f32 %v1592, %v1593
      %v1595 = vsel %vm307, %v1528, 0.0
      %v1596 = vsel %vm307, %v1529, 0.0
      %v1597 = vadd.f32 %v1595, %v1596
      %v1598 = vrot.slane %v1597, 4
      %v1599 = vadd.f32 %v1597, %v1598
      %v1600 = vrot.slane %v1599, 2
      %v1601 = vadd.f32 %v1599, %v1600
      %v1602 = vrot.slane %v1601, 1
      %v1603 = vadd.f32 %v1601, %v1602
      %v1604 = vsel %vm307, %v1530, 0.0
      %v1605 = vsel %vm307, %v1531, 0.0
      %v1606 = vadd.f32 %v1604, %v1605
      %v1607 = vrot.slane %v1606, 4
      %v1608 = vadd.f32 %v1606, %v1607
      %v1609 = vrot.slane %v1608, 2
      %v1610 = vadd.f32 %v1608, %v1609
      %v1611 = vrot.slane %v1610, 1
      %v1612 = vadd.f32 %v1610, %v1611
      %v1613 = vsel %vm307, %v1532, 0.0
      %v1614 = vsel %vm307, %v1533, 0.0
      %v1615 = vadd.f32 %v1613, %v1614
      %v1616 = vrot.slane %v1615, 4
      %v1617 = vadd.f32 %v1615, %v1616
      %v1618 = vrot.slane %v1617, 2
      %v1619 = vadd.f32 %v1617, %v1618
      %v1620 = vrot.slane %v1619, 1
      %v1621 = vadd.f32 %v1619, %v1620
      %v1622 = vsel %vm307, %v1534, 0.0
      %v1623 = vsel %vm307, %v1535, 0.0
      %v1624 = vadd.f32 %v1622, %v1623
      %v1625 = vrot.slane %v1624, 4
      %v1626 = vadd.f32 %v1624, %v1625
      %v1627 = vrot.slane %v1626, 2
      %v1628 = vadd.f32 %v1626, %v1627
      %v1629 = vrot.slane %v1628, 1
      %v1630 = vadd.f32 %v1628, %v1629
      %v1631 = vsel %vm307, %v1536, 0.0
      %v1632 = vsel %vm307, %v1537, 0.0
      %v1633 = vadd.f32 %v1631, %v1632
      %v1634 = vrot.slane %v1633, 4
      %v1635 = vadd.f32 %v1633, %v1634
      %v1636 = vrot.slane %v1635, 2
      %v1637 = vadd.f32 %v1635, %v1636
      %v1638 = vrot.slane %v1637, 1
      %v1639 = vadd.f32 %v1637, %v1638
      %v1640 = vsel %vm307, %v1538, 0.0
      %v1641 = vsel %vm307, %v1539, 0.0
      %v1642 = vadd.f32 %v1640, %v1641
      %v1643 = vrot.slane %v1642, 4
      %v1644 = vadd.f32 %v1642, %v1643
      %v1645 = vrot.slane %v1644, 2
      %v1646 = vadd.f32 %v1644, %v1645
      %v1647 = vrot.slane %v1646, 1
      %v1648 = vadd.f32 %v1646, %v1647
      %v1649 = vsel %vm307, %v1540, 0.0
      %v1650 = vsel %vm307, %v1541, 0.0
      %v1651 = vadd.f32 %v1649, %v1650
      %v1652 = vrot.slane %v1651, 4
      %v1653 = vadd.f32 %v1651, %v1652
      %v1654 = vrot.slane %v1653, 2
      %v1655 = vadd.f32 %v1653, %v1654
      %v1656 = vrot.slane %v1655, 1
      %v1657 = vadd.f32 %v1655, %v1656
      %v1658 = vsel %vm307, %v1542, 0.0
      %v1659 = vsel %vm307, %v1543, 0.0
      %v1660 = vadd.f32 %v1658, %v1659
      %v1661 = vrot.slane %v1660, 4
      %v1662 = vadd.f32 %v1660, %v1661
      %v1663 = vrot.slane %v1662, 2
      %v1664 = vadd.f32 %v1662, %v1663
      %v1665 = vrot.slane %v1664, 1
      %v1666 = vadd.f32 %v1664, %v1665
      %v1667 = vsel %vm307, %v1544, 0.0
      %v1668 = vsel %vm307, %v1545, 0.0
      %v1669 = vadd.f32 %v1667, %v1668
      %v1670 = vrot.slane %v1669, 4
      %v1671 = vadd.f32 %v1669, %v1670
      %v1672 = vrot.slane %v1671, 2
      %v1673 = vadd.f32 %v1671, %v1672
      %v1674 = vrot.slane %v1673, 1
      %v1675 = vadd.f32 %v1673, %v1674
      %v1676 = vsel %vm307, %v1546, 0.0
      %v1677 = vsel %vm307, %v1547, 0.0
      %v1678 = vadd.f32 %v1676, %v1677
      %v1679 = vrot.slane %v1678, 4
      %v1680 = vadd.f32 %v1678, %v1679
      %v1681 = vrot.slane %v1680, 2
      %v1682 = vadd.f32 %v1680, %v1681
      %v1683 = vrot.slane %v1682, 1
      %v1684 = vadd.f32 %v1682, %v1683
      %v1685 = vsel %vm307, %v1548, 0.0
      %v1686 = vsel %vm307, %v1549, 0.0
      %v1687 = vadd.f32 %v1685, %v1686
      %v1688 = vrot.slane %v1687, 4
      %v1689 = vadd.f32 %v1687, %v1688
      %v1690 = vrot.slane %v1689, 2
      %v1691 = vadd.f32 %v1689, %v1690
      %v1692 = vrot.slane %v1691, 1
      %v1693 = vadd.f32 %v1691, %v1692
      %v1694 = vrcp.pop 16.0
      %v1695 = vmul.f32 %v1558, %v1694
      %v1696 = vmul.f32 %v1567, %v1694
      %v1697 = vmul.f32 %v1576, %v1694
      %v1698 = vmul.f32 %v1585, %v1694
      %v1699 = vmul.f32 %v1594, %v1694
      %v1700 = vmul.f32 %v1603, %v1694
      %v1701 = vmul.f32 %v1612, %v1694
      %v1702 = vmul.f32 %v1621, %v1694
      %v1703 = vmul.f32 %v1630, %v1694
      %v1704 = vmul.f32 %v1639, %v1694
      %v1705 = vmul.f32 %v1648, %v1694
      %v1706 = vmul.f32 %v1657, %v1694
      %v1707 = vmul.f32 %v1666, %v1694
      %v1708 = vmul.f32 %v1675, %v1694
      %v1709 = vmul.f32 %v1684, %v1694
      %v1710 = vmul.f32 %v1693, %v1694
      %v1711 = vadd.f32 %v1550, %v1559
      %v1712 = vadd.f32 %v1711, %v1568
      %v1713 = vadd.f32 %v1712, %v1577
      %v1714 = vadd.f32 %v1713, %v1586
      %v1715 = vadd.f32 %v1714, %v1595
      %v1716 = vadd.f32 %v1715, %v1604
      %v1717 = vadd.f32 %v1716, %v1613
      %v1718 = vadd.f32 %v1717, %v1622
      %v1719 = vadd.f32 %v1718, %v1631
      %v1720 = vadd.f32 %v1719, %v1640
      %v1721 = vadd.f32 %v1720, %v1649
      %v1722 = vadd.f32 %v1721, %v1658
      %v1723 = vadd.f32 %v1722, %v1667
      %v1724 = vadd.f32 %v1723, %v1676
      %v1725 = vadd.f32 %v1724, %v1685
      %v1726 = vadd.f32 %v1551, %v1560
      %v1727 = vadd.f32 %v1726, %v1569
      %v1728 = vadd.f32 %v1727, %v1578
      %v1729 = vadd.f32 %v1728, %v1587
      %v1730 = vadd.f32 %v1729, %v1596
      %v1731 = vadd.f32 %v1730, %v1605
      %v1732 = vadd.f32 %v1731, %v1614
      %v1733 = vadd.f32 %v1732, %v1623
      %v1734 = vadd.f32 %v1733, %v1632
      %v1735 = vadd.f32 %v1734, %v1641
      %v1736 = vadd.f32 %v1735, %v1650
      %v1737 = vadd.f32 %v1736, %v1659
      %v1738 = vadd.f32 %v1737, %v1668
      %v1739 = vadd.f32 %v1738, %v1677
      %v1740 = vadd.f32 %v1739, %v1686
      %v1741 = vmul.f32 %v1725, %v1694
      %v1742 = vmul.f32 %v1740, %v1694
      %vm1759 = vcmask 1041409
      %v1760 = vsel %vm1759, %v1696, %v1695
      %vm1761 = vcmask 1042434
      %v1762 = vsel %vm1761, %v1697, %v1760
      %vm1763 = vcmask 1043459
      %v1764 = vsel %vm1763, %v1698, %v1762
      %vm1765 = vcmask 1044484
      %v1766 = vsel %vm1765, %v1699, %v1764
      %vm1767 = vcmask 1045509
      %v1768 = vsel %vm1767, %v1700, %v1766
      %vm1769 = vcmask 1046534
      %v1770 = vsel %vm1769, %v1701, %v1768
      %vm1771 = vcmask 1047559
      %v1772 = vsel %vm1771, %v1702, %v1770
      %v1773 = vsel %vm1759, %v1704, %v1703
      %v1774 = vsel %vm1761, %v1705, %v1773
      %v1775 = vsel %vm1763, %v1706, %v1774
      %v1776 = vsel %vm1765, %v1707, %v1775
      %v1777 = vsel %vm1767, %v1708, %v1776
      %v1778 = vsel %vm1769, %v1709, %v1777
      %v1779 = vsel %vm1771, %v1710, %v1778
      %v1780 = vld [vmem:[%s2] sm:$0xff]
      %v1781 = vld [vmem:[%s3] sm:$0x1]
      %v1783 = vlaneseq
      %v1784 = vshrl.u32 %v1783, 7
      %v1785 = vsub.s32 0, %v1784
      %v1786 = vrot.slane %v1781, %v1785
      %v1788 = vsel %vm307, %v1772, 0
      %v1790 = vsel %vm307, %v1779, 0
      %v1793 = vsel %vm307, %v1741, 0
      %v1796 = vsel %vm307, %v1742, 0
      %1798 = vmatprep.subr.mxu0 0.0
      %1799 = vmatpush1.msra.mxu0 0.0
      %1800 = vmatprep.subr.mxu0 0.0
      %1801 = vmatpush1.msra.mxu0 0.0
      %1802 = vmatprep.subr.mxu0 0.0
      %1803 = vmatpush1.msra.mxu0 0.0
      %1804 = vmatprep.subr.mxu0 0.0
      %1805 = vmatpush1.msra.mxu0 0.0
      %1806 = vmatprep.subr.mxu0 0.0
      %1807 = vmatpush1.msra.mxu0 0.0
      %1808 = vmatprep.subr.mxu0 0.0
      %1809 = vmatpush1.msra.mxu0 0.0
      %1810 = vmatprep.subr.mxu0 0.0
      %1811 = vmatpush1.msra.mxu0 0.0
      %1812 = vmatprep.subr.mxu0 0.0
      %1813 = vmatpush1.msra.mxu0 0.0
      %1814 = vmatprep.subr.mxu0 0.0
      %1815 = vmatpush1.msra.mxu0 0.0
      %1816 = vmatprep.subr.mxu0 0.0
      %1817 = vmatpush1.msra.mxu0 0.0
      %1818 = vmatprep.subr.mxu0 0.0
      %1819 = vmatpush1.msra.mxu0 0.0
      %1820 = vmatprep.subr.mxu0 0.0
      %1821 = vmatpush1.msra.mxu0 0.0
      %1822 = vmatprep.subr.mxu0 0.0
      %1823 = vmatpush1.msra.mxu0 0.0
      %1824 = vmatprep.subr.mxu0 0.0
      %1825 = vmatpush1.msra.mxu0 0.0
      %1826 = vmatprep.subr.mxu0 0.0
      %1827 = vmatpush1.msra.mxu0 0.0
      %1828 = vmatprep.subr.mxu0 0.0
      %1829 = vmatpush1.msra.mxu0 %v1780
      %1830 = vmatprep.subr.mxu0 0.0
      %1831 = vmatpush2.msra.mxu0 0.0
      %1832 = vmatprep.subr.mxu0 0.0
      %1833 = vmatpush2.msra.mxu0 0.0
      %1834 = vmatprep.subr.mxu0 0.0
      %1835 = vmatpush2.msra.mxu0 0.0
      %1836 = vmatprep.subr.mxu0 0.0
      %1837 = vmatpush2.msra.mxu0 0.0
      %1838 = vmatprep.subr.mxu0 0.0
      %1839 = vmatpush2.msra.mxu0 0.0
      %1840 = vmatprep.subr.mxu0 0.0
      %1841 = vmatpush2.msra.mxu0 0.0
      %1842 = vmatprep.subr.mxu0 0.0
      %1843 = vmatpush2.msra.mxu0 0.0
      %1844 = vmatprep.subr.mxu0 0.0
      %1845 = vmatpush2.msra.mxu0 0.0
      %1846 = vmatprep.subr.mxu0 0.0
      %1847 = vmatpush2.msra.mxu0 0.0
      %1848 = vmatprep.subr.mxu0 0.0
      %1849 = vmatpush2.msra.mxu0 0.0
      %1850 = vmatprep.subr.mxu0 0.0
      %1851 = vmatpush2.msra.mxu0 0.0
      %1852 = vmatprep.subr.mxu0 0.0
      %1853 = vmatpush2.msra.mxu0 0.0
      %1854 = vmatprep.subr.mxu0 0.0
      %1855 = vmatpush2.msra.mxu0 0.0
      %1856 = vmatprep.subr.mxu0 0.0
      %1857 = vmatpush2.msra.mxu0 0.0
      %1858 = vmatprep.subr.mxu0 0.0
      %1859 = vmatpush2.msra.mxu0 0.0
      %1860 = vmatprep.subr.mxu0 0.0
      %1861 = vmatpush2.msra.mxu0 0.0
      %1862 = vmatprep.mubr.f32.mxu0 0.0
      %1863 = vmatmul.mubr.f32.gmra.mxu0 %v1788
      %v1864 = vpop.f32.mrf.mxu0
      %v1865 = vadd.f32 %v1786, %v1864
      %v1866 = vpop.f32.mrf.mxu0
      %1867 = vmatprep.mubr.f32.mxu0 0.0
      %1868 = vmatmul.mubr.f32.gmra.mxu0 %v1790
      %v1869 = vpop.f32.mrf.mxu0
      %v1870 = vadd.f32 %v1786, %v1869
      %v1871 = vpop.f32.mrf.mxu0
      %1872 = vmatprep.mubr.f32.mxu0 0.0
      %1873 = vmatmul.mubr.f32.gmra.mxu0 %v1793
      %v1874 = vpop.f32.mrf.mxu0
      %v1875 = vadd.f32 %v1786, %v1874
      %v1876 = vpop.f32.mrf.mxu0
      %1877 = vmatprep.mubr.f32.mxu0 0.0
      %1878 = vmatmul.mubr.f32.gmra.mxu0 %v1796
      %v1879 = vpop.f32.mrf.mxu0
      %v1880 = vadd.f32 %v1786, %v1879
      %v1881 = vpop.f32.mrf.mxu0
      %1882 = vdwg.mxu0
      %v1883 = vadd.f32 %v1865, 3.0
      %v1884 = vadd.f32 %v1870, 3.0
      %v1885 = vadd.f32 %v1875, 3.0
      %v1886 = vadd.f32 %v1880, 3.0
      %v1887 = vmax.f32 %v1883, 0.0
      %v1888 = vmax.f32 %v1884, 0.0
      %v1889 = vmax.f32 %v1885, 0.0
      %v1890 = vmax.f32 %v1886, 0.0
      %v1891 = vmin.f32 %v1887, 6.0
      %v1892 = vmin.f32 %v1888, 6.0
      %v1893 = vmin.f32 %v1889, 6.0
      %v1894 = vmin.f32 %v1890, 6.0
      %v1895 = vmul.f32 %v1891, 0.16666667
      %v1896 = vmul.f32 %v1892, 0.16666667
      %v1897 = vmul.f32 %v1893, 0.16666667
      %v1898 = vmul.f32 %v1894, 0.16666667
      %v1899 = vmul.f32 %v1865, %v1895
      %v1900 = vmul.f32 %v1870, %v1896
      %v1901 = vmul.f32 %v1875, %v1897
      %v1902 = vmul.f32 %v1880, %v1898
      %v1903 = vld [vmem:[%s4] sm:$0xf]
      %v1904 = vld [vmem:[%s5] sm:$0x1]
      %v1906 = vlaneseq
      %v1907 = vshrl.u32 %v1906, 7
      %v1908 = vsub.s32 0, %v1907
      %v1909 = vrot.slane %v1904, %v1908
      %vm1911 = vcmask 31744
      %v1913 = vsel %vm1911, %v1899, 0
      %v1916 = vsel %vm1911, %v1900, 0
      %v1919 = vsel %vm997, %v1903, 0
      %1921 = vmatprep.subr.mxu0 0.0
      %1922 = vmatpush1.msra.mxu0 0.0
      %1923 = vmatprep.subr.mxu0 0.0
      %1924 = vmatpush1.msra.mxu0 0.0
      %1925 = vmatprep.subr.mxu0 0.0
      %1926 = vmatpush1.msra.mxu0 0.0
      %1927 = vmatprep.subr.mxu0 0.0
      %1928 = vmatpush1.msra.mxu0 0.0
      %1929 = vmatprep.subr.mxu0 0.0
      %1930 = vmatpush1.msra.mxu0 0.0
      %1931 = vmatprep.subr.mxu0 0.0
      %1932 = vmatpush1.msra.mxu0 0.0
      %1933 = vmatprep.subr.mxu0 0.0
      %1934 = vmatpush1.msra.mxu0 0.0
      %1935 = vmatprep.subr.mxu0 0.0
      %1936 = vmatpush1.msra.mxu0 0.0
      %1937 = vmatprep.subr.mxu0 0.0
      %1938 = vmatpush1.msra.mxu0 0.0
      %1939 = vmatprep.subr.mxu0 0.0
      %1940 = vmatpush1.msra.mxu0 0.0
      %1941 = vmatprep.subr.mxu0 0.0
      %1942 = vmatpush1.msra.mxu0 0.0
      %1943 = vmatprep.subr.mxu0 0.0
      %1944 = vmatpush1.msra.mxu0 0.0
      %1945 = vmatprep.subr.mxu0 0.0
      %1946 = vmatpush1.msra.mxu0 0.0
      %1947 = vmatprep.subr.mxu0 0.0
      %1948 = vmatpush1.msra.mxu0 0.0
      %1949 = vmatprep.subr.mxu0 0.0
      %1950 = vmatpush1.msra.mxu0 0.0
      %1951 = vmatprep.subr.mxu0 0.0
      %1952 = vmatpush1.msra.mxu0 %v1919
      %1953 = vmatprep.subr.mxu0 0.0
      %1954 = vmatpush2.msra.mxu0 0.0
      %1955 = vmatprep.subr.mxu0 0.0
      %1956 = vmatpush2.msra.mxu0 0.0
      %1957 = vmatprep.subr.mxu0 0.0
      %1958 = vmatpush2.msra.mxu0 0.0
      %1959 = vmatprep.subr.mxu0 0.0
      %1960 = vmatpush2.msra.mxu0 0.0
      %1961 = vmatprep.subr.mxu0 0.0
      %1962 = vmatpush2.msra.mxu0 0.0
      %1963 = vmatprep.subr.mxu0 0.0
      %1964 = vmatpush2.msra.mxu0 0.0
      %1965 = vmatprep.subr.mxu0 0.0
      %1966 = vmatpush2.msra.mxu0 0.0
      %1967 = vmatprep.subr.mxu0 0.0
      %1968 = vmatpush2.msra.mxu0 0.0
      %1969 = vmatprep.subr.mxu0 0.0
      %1970 = vmatpush2.msra.mxu0 0.0
      %1971 = vmatprep.subr.mxu0 0.0
      %1972 = vmatpush2.msra.mxu0 0.0
      %1973 = vmatprep.subr.mxu0 0.0
      %1974 = vmatpush2.msra.mxu0 0.0
      %1975 = vmatprep.subr.mxu0 0.0
      %1976 = vmatpush2.msra.mxu0 0.0
      %1977 = vmatprep.subr.mxu0 0.0
      %1978 = vmatpush2.msra.mxu0 0.0
      %1979 = vmatprep.subr.mxu0 0.0
      %1980 = vmatpush2.msra.mxu0 0.0
      %1981 = vmatprep.subr.mxu0 0.0
      %1982 = vmatpush2.msra.mxu0 0.0
      %1983 = vmatprep.subr.mxu0 0.0
      %1984 = vmatpush2.msra.mxu0 0.0
      %1985 = vmatprep.mubr.f32.mxu0 0.0
      %1986 = vmatmul.mubr.f32.gmra.mxu0 %v1913
      %v1987 = vpop.f32.mrf.mxu0
      %v1988 = vadd.f32 %v1909, %v1987
      %v1989 = vpop.f32.mrf.mxu0
      %1990 = vmatprep.mubr.f32.mxu0 0.0
      %1991 = vmatmul.mubr.f32.gmra.mxu0 %v1916
      %v1992 = vpop.f32.mrf.mxu0
      %v1993 = vadd.f32 %v1909, %v1992
      %v1994 = vpop.f32.mrf.mxu0
      %1995 = vdwg.mxu0
      %v1996 = vxor.u32 %v1988, 2147483648
      %v1997 = vxor.u32 %v1993, 2147483648
      %v1998 = vmul.f32 %v1996, 1.442695
      %v1999 = vpow.pop %v1998
      %v2000 = vmul.f32 %v1997, 1.442695
      %v2001 = vpow.pop %v2000
      %v2002 = vadd.f32 %v1999, 1.0
      %v2003 = vadd.f32 %v2001, 1.0
      %v2004 = vrcp.pop %v2002
      %v2005 = vmul.f32 1.0, %v2004
      %v2006 = vrcp.pop %v2003
      %v2007 = vmul.f32 1.0, %v2006
      %v2008 = vld [vmem:[%s6] sm:$0xf]
      %v2009 = vld [vmem:[%s7] sm:$0x1]
      %v2011 = vlaneseq
      %v2012 = vshrl.u32 %v2011, 7
      %v2013 = vsub.s32 0, %v2012
      %v2014 = vrot.slane %v2009, %v2013
      %v2017 = vsel %vm1911, %v1901, 0
      %v2020 = vsel %vm1911, %v1902, 0
      %v2023 = vsel %vm997, %v2008, 0
      %2025 = vmatprep.subr.mxu0 0.0
      %2026 = vmatpush1.msra.mxu0 0.0
      %2027 = vmatprep.subr.mxu0 0.0
      %2028 = vmatpush1.msra.mxu0 0.0
      %2029 = vmatprep.subr.mxu0 0.0
      %2030 = vmatpush1.msra.mxu0 0.0
      %2031 = vmatprep.subr.mxu0 0.0
      %2032 = vmatpush1.msra.mxu0 0.0
      %2033 = vmatprep.subr.mxu0 0.0
      %2034 = vmatpush1.msra.mxu0 0.0
      %2035 = vmatprep.subr.mxu0 0.0
      %2036 = vmatpush1.msra.mxu0 0.0
      %2037 = vmatprep.subr.mxu0 0.0
      %2038 = vmatpush1.msra.mxu0 0.0
      %2039 = vmatprep.subr.mxu0 0.0
      %2040 = vmatpush1.msra.mxu0 0.0
      %2041 = vmatprep.subr.mxu0 0.0
      %2042 = vmatpush1.msra.mxu0 0.0
      %2043 = vmatprep.subr.mxu0 0.0
      %2044 = vmatpush1.msra.mxu0 0.0
      %2045 = vmatprep.subr.mxu0 0.0
      %2046 = vmatpush1.msra.mxu0 0.0
      %2047 = vmatprep.subr.mxu0 0.0
      %2048 = vmatpush1.msra.mxu0 0.0
      %2049 = vmatprep.subr.mxu0 0.0
      %2050 = vmatpush1.msra.mxu0 0.0
      %2051 = vmatprep.subr.mxu0 0.0
      %2052 = vmatpush1.msra.mxu0 0.0
      %2053 = vmatprep.subr.mxu0 0.0
      %2054 = vmatpush1.msra.mxu0 0.0
      %2055 = vmatprep.subr.mxu0 0.0
      %2056 = vmatpush1.msra.mxu0 %v2023
      %2057 = vmatprep.subr.mxu0 0.0
      %2058 = vmatpush2.msra.mxu0 0.0
      %2059 = vmatprep.subr.mxu0 0.0
      %2060 = vmatpush2.msra.mxu0 0.0
      %2061 = vmatprep.subr.mxu0 0.0
      %2062 = vmatpush2.msra.mxu0 0.0
      %2063 = vmatprep.subr.mxu0 0.0
      %2064 = vmatpush2.msra.mxu0 0.0
      %2065 = vmatprep.subr.mxu0 0.0
      %2066 = vmatpush2.msra.mxu0 0.0
      %2067 = vmatprep.subr.mxu0 0.0
      %2068 = vmatpush2.msra.mxu0 0.0
      %2069 = vmatprep.subr.mxu0 0.0
      %2070 = vmatpush2.msra.mxu0 0.0
      %2071 = vmatprep.subr.mxu0 0.0
      %2072 = vmatpush2.msra.mxu0 0.0
      %2073 = vmatprep.subr.mxu0 0.0
      %2074 = vmatpush2.msra.mxu0 0.0
      %2075 = vmatprep.subr.mxu0 0.0
      %2076 = vmatpush2.msra.mxu0 0.0
      %2077 = vmatprep.subr.mxu0 0.0
      %2078 = vmatpush2.msra.mxu0 0.0
      %2079 = vmatprep.subr.mxu0 0.0
      %2080 = vmatpush2.msra.mxu0 0.0
      %2081 = vmatprep.subr.mxu0 0.0
      %2082 = vmatpush2.msra.mxu0 0.0
      %2083 = vmatprep.subr.mxu0 0.0
      %2084 = vmatpush2.msra.mxu0 0.0
      %2085 = vmatprep.subr.mxu0 0.0
      %2086 = vmatpush2.msra.mxu0 0.0
      %2087 = vmatprep.subr.mxu0 0.0
      %2088 = vmatpush2.msra.mxu0 0.0
      %2089 = vmatprep.mubr.f32.mxu0 0.0
      %2090 = vmatmul.mubr.f32.gmra.mxu0 %v2017
      %v2091 = vpop.f32.mrf.mxu0
      %v2092 = vadd.f32 %v2014, %v2091
      %v2093 = vpop.f32.mrf.mxu0
      %2094 = vmatprep.mubr.f32.mxu0 0.0
      %2095 = vmatmul.mubr.f32.gmra.mxu0 %v2020
      %v2096 = vpop.f32.mrf.mxu0
      %v2097 = vadd.f32 %v2014, %v2096
      %v2098 = vpop.f32.mrf.mxu0
      %2099 = vdwg.mxu0
      %v2100 = vxor.u32 %v2092, 2147483648
      %v2101 = vxor.u32 %v2097, 2147483648
      %v2102 = vmul.f32 %v2100, 1.442695
      %v2103 = vpow.pop %v2102
      %v2104 = vmul.f32 %v2101, 1.442695
      %v2105 = vpow.pop %v2104
      %v2106 = vadd.f32 %v2103, 1.0
      %v2107 = vadd.f32 %v2105, 1.0
      %v2108 = vrcp.pop %v2106
      %v2109 = vmul.f32 1.0, %v2108
      %v2110 = vrcp.pop %v2107
      %v2111 = vmul.f32 1.0, %v2110
      %v2112 = vmul.f32 %v1518, %v2109
      %v2113 = vmul.f32 %v1519, %v2111
      %v2114 = vmul.f32 %v1520, %v2109
      %v2115 = vmul.f32 %v1521, %v2111
      %v2116 = vmul.f32 %v1522, %v2109
      %v2117 = vmul.f32 %v1523, %v2111
      %v2118 = vmul.f32 %v1524, %v2109
      %v2119 = vmul.f32 %v1525, %v2111
      %v2120 = vmul.f32 %v1526, %v2109
      %v2121 = vmul.f32 %v1527, %v2111
      %v2122 = vmul.f32 %v1528, %v2109
      %v2123 = vmul.f32 %v1529, %v2111
      %v2124 = vmul.f32 %v1530, %v2109
      %v2125 = vmul.f32 %v1531, %v2111
      %v2126 = vmul.f32 %v1532, %v2109
      %v2127 = vmul.f32 %v1533, %v2111
      %v2128 = vmul.f32 %v1534, %v2109
      %v2129 = vmul.f32 %v1535, %v2111
      %v2130 = vmul.f32 %v1536, %v2109
      %v2131 = vmul.f32 %v1537, %v2111
      %v2132 = vmul.f32 %v1538, %v2109
      %v2133 = vmul.f32 %v1539, %v2111
      %v2134 = vmul.f32 %v1540, %v2109
      %v2135 = vmul.f32 %v1541, %v2111
      %v2136 = vmul.f32 %v1542, %v2109
      %v2137 = vmul.f32 %v1543, %v2111
      %v2138 = vmul.f32 %v1544, %v2109
      %v2139 = vmul.f32 %v1545, %v2111
      %v2140 = vmul.f32 %v1546, %v2109
      %v2141 = vmul.f32 %v1547, %v2111
      %v2142 = vmul.f32 %v1548, %v2109
      %v2143 = vmul.f32 %v1549, %v2111
      %v2146 = vcombine.high %v2005, %v2005
      %v2148 = vunpack.c.l.s4 1966171168
      %v2149 = vunpack.c.0.s8 %v2148
      %v2150 = vlaneseq
      %v2151 = vshrl.u32 %v2150, 7
      %v2152 = vsub.s32 %v2149, %v2151
      %v2153 = vrot.slane %v2005, %v2152
      %v2155 = vunpack.c.l.s4 1966171168
      %v2156 = vunpack.c.0.s8 %v2155
      %v2157 = vlaneseq
      %v2158 = vshrl.u32 %v2157, 7
      %v2159 = vsub.s32 %v2156, %v2158
      %v2160 = vrot.slane %v2146, %v2159
      %v2161 = vcombine.high %v2153, %v2153
      %v2162 = vcombine.high %v2160, %v2160
      %v2164 = vunpack.c.l.s4 1966171168
      %v2165 = vunpack.c.0.s8 %v2164
      %v2166 = vlaneseq
      %v2167 = vshrl.u32 %v2166, 7
      %v2168 = vsub.s32 %v2165, %v2167
      %v2169 = vrot.slane %v2153, %v2168
      %v2171 = vunpack.c.l.s4 1966171168
      %v2172 = vunpack.c.0.s8 %v2171
      %v2173 = vlaneseq
      %v2174 = vshrl.u32 %v2173, 7
      %v2175 = vsub.s32 %v2172, %v2174
      %v2176 = vrot.slane %v2160, %v2175
      %v2178 = vunpack.c.l.s4 1966171168
      %v2179 = vunpack.c.0.s8 %v2178
      %v2180 = vlaneseq
      %v2181 = vshrl.u32 %v2180, 7
      %v2182 = vsub.s32 %v2179, %v2181
      %v2183 = vrot.slane %v2161, %v2182
      %v2185 = vunpack.c.l.s4 1966171168
      %v2186 = vunpack.c.0.s8 %v2185
      %v2187 = vlaneseq
      %v2188 = vshrl.u32 %v2187, 7
      %v2189 = vsub.s32 %v2186, %v2188
      %v2190 = vrot.slane %v2162, %v2189
      %v2191 = vcombine.high %v2169, %v2169
      %v2192 = vcombine.high %v2176, %v2176
      %v2193 = vcombine.high %v2183, %v2183
      %v2194 = vcombine.high %v2190, %v2190
      %v2195 = vcombine.high %v2007, %v2007
      %v2197 = vunpack.c.l.s4 1966171168
      %v2198 = vunpack.c.0.s8 %v2197
      %v2199 = vlaneseq
      %v2200 = vshrl.u32 %v2199, 7
      %v2201 = vsub.s32 %v2198, %v2200
      %v2202 = vrot.slane %v2007, %v2201
      %v2204 = vunpack.c.l.s4 1966171168
      %v2205 = vunpack.c.0.s8 %v2204
      %v2206 = vlaneseq
      %v2207 = vshrl.u32 %v2206, 7
      %v2208 = vsub.s32 %v2205, %v2207
      %v2209 = vrot.slane %v2195, %v2208
      %v2210 = vcombine.high %v2202, %v2202
      %v2211 = vcombine.high %v2209, %v2209
      %v2213 = vunpack.c.l.s4 1966171168
      %v2214 = vunpack.c.0.s8 %v2213
      %v2215 = vlaneseq
      %v2216 = vshrl.u32 %v2215, 7
      %v2217 = vsub.s32 %v2214, %v2216
      %v2218 = vrot.slane %v2202, %v2217
      %v2220 = vunpack.c.l.s4 1966171168
      %v2221 = vunpack.c.0.s8 %v2220
      %v2222 = vlaneseq
      %v2223 = vshrl.u32 %v2222, 7
      %v2224 = vsub.s32 %v2221, %v2223
      %v2225 = vrot.slane %v2209, %v2224
      %v2227 = vunpack.c.l.s4 1966171168
      %v2228 = vunpack.c.0.s8 %v2227
      %v2229 = vlaneseq
      %v2230 = vshrl.u32 %v2229, 7
      %v2231 = vsub.s32 %v2228, %v2230
      %v2232 = vrot.slane %v2210, %v2231
      %v2234 = vunpack.c.l.s4 1966171168
      %v2235 = vunpack.c.0.s8 %v2234
      %v2236 = vlaneseq
      %v2237 = vshrl.u32 %v2236, 7
      %v2238 = vsub.s32 %v2235, %v2237
      %v2239 = vrot.slane %v2211, %v2238
      %v2240 = vcombine.high %v2218, %v2218
      %v2241 = vcombine.high %v2225, %v2225
      %v2242 = vcombine.high %v2232, %v2232
      %v2243 = vcombine.high %v2239, %v2239
      %v2244 = vlaneseq
      %v2245 = vshrl.u32 %v2244, 7
      %v2246 = vsub.s32 0, %v2245
      %v2247 = vrot.slane %v2169, %v2246
      %v2248 = vlaneseq
      %v2249 = vshrl.u32 %v2248, 7
      %v2250 = vsub.s32 0, %v2249
      %v2251 = vrot.slane %v2183, %v2250
      %v2252 = vlaneseq
      %v2253 = vshrl.u32 %v2252, 7
      %v2254 = vsub.s32 0, %v2253
      %v2255 = vrot.slane %v2191, %v2254
      %v2256 = vlaneseq
      %v2257 = vshrl.u32 %v2256, 7
      %v2258 = vsub.s32 0, %v2257
      %v2259 = vrot.slane %v2193, %v2258
      %v2260 = vlaneseq
      %v2261 = vshrl.u32 %v2260, 7
      %v2262 = vsub.s32 0, %v2261
      %v2263 = vrot.slane %v2176, %v2262
      %v2264 = vlaneseq
      %v2265 = vshrl.u32 %v2264, 7
      %v2266 = vsub.s32 0, %v2265
      %v2267 = vrot.slane %v2190, %v2266
      %v2268 = vlaneseq
      %v2269 = vshrl.u32 %v2268, 7
      %v2270 = vsub.s32 0, %v2269
      %v2271 = vrot.slane %v2192, %v2270
      %v2272 = vlaneseq
      %v2273 = vshrl.u32 %v2272, 7
      %v2274 = vsub.s32 0, %v2273
      %v2275 = vrot.slane %v2194, %v2274
      %v2276 = vlaneseq
      %v2277 = vshrl.u32 %v2276, 7
      %v2278 = vsub.s32 0, %v2277
      %v2279 = vrot.slane %v2218, %v2278
      %v2280 = vlaneseq
      %v2281 = vshrl.u32 %v2280, 7
      %v2282 = vsub.s32 0, %v2281
      %v2283 = vrot.slane %v2232, %v2282
      %v2284 = vlaneseq
      %v2285 = vshrl.u32 %v2284, 7
      %v2286 = vsub.s32 0, %v2285
      %v2287 = vrot.slane %v2240, %v2286
      %v2288 = vlaneseq
      %v2289 = vshrl.u32 %v2288, 7
      %v2290 = vsub.s32 0, %v2289
      %v2291 = vrot.slane %v2242, %v2290
      %v2292 = vlaneseq
      %v2293 = vshrl.u32 %v2292, 7
      %v2294 = vsub.s32 0, %v2293
      %v2295 = vrot.slane %v2225, %v2294
      %v2296 = vlaneseq
      %v2297 = vshrl.u32 %v2296, 7
      %v2298 = vsub.s32 0, %v2297
      %v2299 = vrot.slane %v2239, %v2298
      %v2300 = vlaneseq
      %v2301 = vshrl.u32 %v2300, 7
      %v2302 = vsub.s32 0, %v2301
      %v2303 = vrot.slane %v2241, %v2302
      %v2304 = vlaneseq
      %v2305 = vshrl.u32 %v2304, 7
      %v2306 = vsub.s32 0, %v2305
      %v2307 = vrot.slane %v2243, %v2306
      %v2324 = vmul.f32 %v2112, %v2247
      %v2325 = vmul.f32 %v2113, %v2247
      %v2326 = vmul.f32 %v2114, %v2251
      %v2327 = vmul.f32 %v2115, %v2251
      %v2328 = vmul.f32 %v2116, %v2255
      %v2329 = vmul.f32 %v2117, %v2255
      %v2330 = vmul.f32 %v2118, %v2259
      %v2331 = vmul.f32 %v2119, %v2259
      %v2332 = vmul.f32 %v2120, %v2263
      %v2333 = vmul.f32 %v2121, %v2263
      %v2334 = vmul.f32 %v2122, %v2267
      %v2335 = vmul.f32 %v2123, %v2267
      %v2336 = vmul.f32 %v2124, %v2271
      %v2337 = vmul.f32 %v2125, %v2271
      %v2338 = vmul.f32 %v2126, %v2275
      %v2339 = vmul.f32 %v2127, %v2275
      %v2340 = vmul.f32 %v2128, %v2279
      %v2341 = vmul.f32 %v2129, %v2279
      %v2342 = vmul.f32 %v2130, %v2283
      %v2343 = vmul.f32 %v2131, %v2283
      %v2344 = vmul.f32 %v2132, %v2287
      %v2345 = vmul.f32 %v2133, %v2287
      %v2346 = vmul.f32 %v2134, %v2291
      %v2347 = vmul.f32 %v2135, %v2291
      %v2348 = vmul.f32 %v2136, %v2295
      %v2349 = vmul.f32 %v2137, %v2295
      %v2350 = vmul.f32 %v2138, %v2299
      %v2351 = vmul.f32 %v2139, %v2299
      %v2352 = vmul.f32 %v2140, %v2303
      %v2353 = vmul.f32 %v2141, %v2303
      %v2354 = vmul.f32 %v2142, %v2307
      %v2355 = vmul.f32 %v2143, %v2307
      %v2356 = vld [vmem:[%s300] sm:$0xff]
      %v2357 = vld [vmem:[%s300 + $0x8] sm:$0xff]
      %v2358 = vld [vmem:[%s300 + $0x10] sm:$0xff]
      %v2359 = vld [vmem:[%s300 + $0x18] sm:$0xff]
      %v2360 = vld [vmem:[%s300 + $0x20] sm:$0xff]
      %v2361 = vld [vmem:[%s300 + $0x28] sm:$0xff]
      %v2362 = vld [vmem:[%s300 + $0x30] sm:$0xff]
      %v2363 = vld [vmem:[%s300 + $0x38] sm:$0xff]
      %v2364 = vld [vmem:[%s300 + $0x40] sm:$0xff]
      %v2365 = vld [vmem:[%s300 + $0x48] sm:$0xff]
      %v2366 = vld [vmem:[%s300 + $0x50] sm:$0xff]
      %v2367 = vld [vmem:[%s300 + $0x58] sm:$0xff]
      %v2368 = vld [vmem:[%s300 + $0x60] sm:$0xff]
      %v2369 = vld [vmem:[%s300 + $0x68] sm:$0xff]
      %v2370 = vld [vmem:[%s300 + $0x70] sm:$0xff]
      %v2371 = vld [vmem:[%s300 + $0x78] sm:$0xff]
      %v2372 = vld [vmem:[%s300 + $0x80] sm:$0xff]
      %v2373 = vld [vmem:[%s300 + $0x88] sm:$0xff]
      %v2374 = vld [vmem:[%s300 + $0x90] sm:$0xff]
      %v2375 = vld [vmem:[%s300 + $0x98] sm:$0xff]
      %v2376 = vld [vmem:[%s300 + $0xa0] sm:$0xff]
      %v2377 = vld [vmem:[%s300 + $0xa8] sm:$0xff]
      %v2378 = vld [vmem:[%s300 + $0xb0] sm:$0xff]
      %v2379 = vld [vmem:[%s300 + $0xb8] sm:$0xff]
      %v2380 = vld [vmem:[%s300 + $0xc0] sm:$0xff]
      %v2381 = vld [vmem:[%s300 + $0xc8] sm:$0xff]
      %v2382 = vld [vmem:[%s300 + $0xd0] sm:$0xff]
      %v2383 = vld [vmem:[%s300 + $0xd8] sm:$0xff]
      %v2384 = vld [vmem:[%s300 + $0xe0] sm:$0xff]
      %v2385 = vld [vmem:[%s300 + $0xe8] sm:$0xff]
      %v2386 = vld [vmem:[%s300 + $0xf0] sm:$0xff]
      %v2387 = vld [vmem:[%s300 + $0xf8] sm:$0xff]
      %v2388 = vadd.f32 %v2356, %v2324
      %v2389 = vadd.f32 %v2357, %v2325
      %v2390 = vadd.f32 %v2358, %v2326
      %v2391 = vadd.f32 %v2359, %v2327
      %v2392 = vadd.f32 %v2360, %v2328
      %v2393 = vadd.f32 %v2361, %v2329
      %v2394 = vadd.f32 %v2362, %v2330
      %v2395 = vadd.f32 %v2363, %v2331
      %v2396 = vadd.f32 %v2364, %v2332
      %v2397 = vadd.f32 %v2365, %v2333
      %v2398 = vadd.f32 %v2366, %v2334
      %v2399 = vadd.f32 %v2367, %v2335
      %v2400 = vadd.f32 %v2368, %v2336
      %v2401 = vadd.f32 %v2369, %v2337
      %v2402 = vadd.f32 %v2370, %v2338
      %v2403 = vadd.f32 %v2371, %v2339
      %v2404 = vadd.f32 %v2372, %v2340
      %v2405 = vadd.f32 %v2373, %v2341
      %v2406 = vadd.f32 %v2374, %v2342
      %v2407 = vadd.f32 %v2375, %v2343
      %v2408 = vadd.f32 %v2376, %v2344
      %v2409 = vadd.f32 %v2377, %v2345
      %v2410 = vadd.f32 %v2378, %v2346
      %v2411 = vadd.f32 %v2379, %v2347
      %v2412 = vadd.f32 %v2380, %v2348
      %v2413 = vadd.f32 %v2381, %v2349
      %v2414 = vadd.f32 %v2382, %v2350
      %v2415 = vadd.f32 %v2383, %v2351
      %v2416 = vadd.f32 %v2384, %v2352
      %v2417 = vadd.f32 %v2385, %v2353
      %v2418 = vadd.f32 %v2386, %v2354
      %v2419 = vadd.f32 %v2387, %v2355
      %2420 = vst.msk [vmem:[%s305] sm:$0xff] %vm307, %v2388
      %2421 = vst.msk [vmem:[%s305 + $0x8] sm:$0xff] %vm307, %v2389
      %2422 = vst.msk [vmem:[%s305 + $0x10] sm:$0xff] %vm307, %v2390
      %2423 = vst.msk [vmem:[%s305 + $0x18] sm:$0xff] %vm307, %v2391
      %2424 = vst.msk [vmem:[%s305 + $0x20] sm:$0xff] %vm307, %v2392
      %2425 = vst.msk [vmem:[%s305 + $0x28] sm:$0xff] %vm307, %v2393
      %2426 = vst.msk [vmem:[%s305 + $0x30] sm:$0xff] %vm307, %v2394
      %2427 = vst.msk [vmem:[%s305 + $0x38] sm:$0xff] %vm307, %v2395
      %2428 = vst.msk [vmem:[%s305 + $0x40] sm:$0xff] %vm307, %v2396
      %2429 = vst.msk [vmem:[%s305 + $0x48] sm:$0xff] %vm307, %v2397
      %2430 = vst.msk [vmem:[%s305 + $0x50] sm:$0xff] %vm307, %v2398
      %2431 = vst.msk [vmem:[%s305 + $0x58] sm:$0xff] %vm307, %v2399
      %2432 = vst.msk [vmem:[%s305 + $0x60] sm:$0xff] %vm307, %v2400
      %2433 = vst.msk [vmem:[%s305 + $0x68] sm:$0xff] %vm307, %v2401
      %2434 = vst.msk [vmem:[%s305 + $0x70] sm:$0xff] %vm307, %v2402
      %2435 = vst.msk [vmem:[%s305 + $0x78] sm:$0xff] %vm307, %v2403
      %2436 = vst.msk [vmem:[%s305 + $0x80] sm:$0xff] %vm307, %v2404
      %2437 = vst.msk [vmem:[%s305 + $0x88] sm:$0xff] %vm307, %v2405
      %2438 = vst.msk [vmem:[%s305 + $0x90] sm:$0xff] %vm307, %v2406
      %2439 = vst.msk [vmem:[%s305 + $0x98] sm:$0xff] %vm307, %v2407
      %2440 = vst.msk [vmem:[%s305 + $0xa0] sm:$0xff] %vm307, %v2408
      %2441 = vst.msk [vmem:[%s305 + $0xa8] sm:$0xff] %vm307, %v2409
      %2442 = vst.msk [vmem:[%s305 + $0xb0] sm:$0xff] %vm307, %v2410
      %2443 = vst.msk [vmem:[%s305 + $0xb8] sm:$0xff] %vm307, %v2411
      %2444 = vst.msk [vmem:[%s305 + $0xc0] sm:$0xff] %vm307, %v2412
      %2445 = vst.msk [vmem:[%s305 + $0xc8] sm:$0xff] %vm307, %v2413
      %2446 = vst.msk [vmem:[%s305 + $0xd0] sm:$0xff] %vm307, %v2414
      %2447 = vst.msk [vmem:[%s305 + $0xd8] sm:$0xff] %vm307, %v2415
      %2448 = vst.msk [vmem:[%s305 + $0xe0] sm:$0xff] %vm307, %v2416
      %2449 = vst.msk [vmem:[%s305 + $0xe8] sm:$0xff] %vm307, %v2417
      %2450 = vst.msk [vmem:[%s305 + $0xf0] sm:$0xff] %vm307, %v2418
      %2451 = vst.msk [vmem:[%s305 + $0xf8] sm:$0xff] %vm307, %v2419
      %p2452 = scmp.lt.s32.totalorder %s19, 1
      %s2453 = scalar_select %p2452, %s19, 1
      %s2454 = smul.addr %s2453, 32
      %s2455 = smul.addr %s2454, 8
      %s2456 = scalar_lea.vmem %s8, %s2455
      // Predicated region
      $region53: #{tpu_custom_call.1} parent=51 // pred_check
        %p2457 = pneg %p210
      $region54: #{tpu_custom_call.1} parent=51 // pred_check_branch
        %2459 = sbr.rel (%p2457) target = $region56
      $region55: #{tpu_custom_call.1} parent=51 // pred_region
        _
      $region56: #{tpu_custom_call.1} parent=51 // pred_fallthru
        _
    $region52: #{tpu_custom_call.1} parent=5 // pred_fallthru
      _
    %p2460 = scmp.le.s32.totalorder 2, %s14
    // Predicated region
    $region57: #{tpu_custom_call.1} parent=5 // pred_check
      %p2461 = pneg %p2460
    $region58: #{tpu_custom_call.1} parent=5 // pred_check_branch
      %2463 = sbr.rel (%p2461) target = $region60
    $region59: #{tpu_custom_call.1} parent=5 // pred_region
      %s2464 = ssub.s32 %s14, 2
      // Predicated region
      $region61: #{tpu_custom_call.1} parent=59 // pred_check
        %p2465 = pneg %p216
      $region62: #{tpu_custom_call.1} parent=59 // pred_check_branch
        %2467 = sbr.rel (%p2465) target = $region64
      $region63: #{tpu_custom_call.1} parent=59 // pred_region
        %p2468 = scmp.lt.s32.totalorder %s20, 1
        %s2469 = scalar_select %p2468, %s20, 1
        %s2470 = smul.addr %s2469, 32
        %s2471 = smul.addr %s2470, 8
        %s2472 = scalar_lea.vmem %s8, %s2471
      $region64: #{tpu_custom_call.1} parent=59 // pred_fallthru
        _
    $region60: #{tpu_custom_call.1} parent=5 // pred_fallthru
      _
  $region6: #{tpu_custom_call.1} parent=0 // loop_footer
    %s18 = sadd.s32 1, %s14
  $region7: #{tpu_custom_call.1} parent=0 // loop_footer_branch
    %13 = sbr.rel target = $region3
  $region8: #{tpu_custom_call.1} parent=0 // loop_exit
    _

</llo_original>
